<compile_context>
chip_gen: v7x
topology: tpu7x:2x2x1
jax: 0.10.0
libtpu: 0.0.40
codegen_flags: <defaults>
</compile_context>

<pallas_src>
import functools

import jax
import jax.numpy as jnp
import numpy as np
from jax.experimental import pallas as pl
from jax.experimental.pallas import tpu as pltpu

NEG_SLOPE = 0.01
BN_EPS = 1e-5  # nn.BatchNorm3d default eps


# ----------------------------------------------------------------------------- kernels
def _conv_body(a, band_ref, y_ref, stats_ref, pad_ref):
    """Banded 3x3 conv of activation tile `a` + per-tile partial BN statistics.

    a        : (TB, H, WC) activation tile (float)
    band_ref : (3, WC, WC) banded weights (compute dtype), one matrix per kh tap
    y_ref    : (TB, H, WC) conv output tile
    stats_ref: (1, 2, WC)  per-tile [sum, sum_of_squares] over rows (lane = w*C + c)
    pad_ref  : (TB, H+2, WC) f32 halo scratch; only the 2 halo rows get zeroed
    """
    tb, h, wc = y_ref.shape
    cd = band_ref.dtype

    # Zero only the halo rows; the interior is fully overwritten right below.
    zrow = jnp.zeros((tb, 1, wc), pad_ref.dtype)
    pad_ref[:, 0:1, :] = zrow
    pad_ref[:, h + 1:h + 2, :] = zrow
    pad_ref[:, 1:h + 1, :] = a.astype(pad_ref.dtype)

    # Three lane-dense matmuls (one per kh tap), f32 accumulation on the MXU.
    acc = None
    for kh in range(3):
        lhs = pad_ref[:, kh:kh + h, :].reshape(tb * h, wc).astype(cd)
        part = jnp.dot(lhs, band_ref[kh], preferred_element_type=jnp.float32)
        acc = part if acc is None else acc + part

    # One-pass statistics (sum, sum of squares) per lane group; reduced on the host.
    ssum = jnp.sum(acc, axis=0, keepdims=True)         # (1, WC) f32
    ssq = jnp.sum(acc * acc, axis=0, keepdims=True)    # (1, WC) f32
    stats_ref[0, 0:1, :] = ssum
    stats_ref[0, 1:2, :] = ssq

    y_ref[...] = acc.reshape(tb, h, wc).astype(y_ref.dtype)


def _conv_stats_kernel(x_ref, band_ref, y_ref, stats_ref, pad_ref):
    """Sweep 1: y = conv1(x) plus partial BN1 statistics."""
    _conv_body(x_ref[...], band_ref, y_ref, stats_ref, pad_ref)


def _bn_conv_stats_kernel(yin_ref, scale_ref, shift_ref, band_ref, y_ref,
                          stats_ref, pad_ref):
    """Sweep 2: a = lrelu(yin*scale + shift); y = conv2(a) plus partial BN2 stats."""
    a = yin_ref[...].astype(jnp.float32) * scale_ref[...] + shift_ref[...]
    a = jnp.where(a > 0, a, NEG_SLOPE * a)
    _conv_body(a, band_ref, y_ref, stats_ref, pad_ref)


def _bn_residual_kernel(yin_ref, x_ref, scale_ref, shift_ref, o_ref):
    """Sweep 3: out = x + lrelu(yin*scale + shift)   (all elementwise, f32)."""
    y = yin_ref[...].astype(jnp.float32) * scale_ref[...] + shift_ref[...]
    y = jnp.where(y > 0, y, NEG_SLOPE * y)
    o_ref[...] = (y + x_ref[...].astype(jnp.float32)).astype(o_ref.dtype)


# -------------------------------------------------------------------- host-side helpers
def _conv_weight_to_bands(w_pt, w_dim):
    """(C_out, C_in, 1, 3, 3) PyTorch Conv3d weight -> (3, W*C_in, W*C_out) bands.

    band[kh, w_in*C_in + ci, w_out*C_out + co] = w[co, ci, 0, kh, w_in - w_out + 1]
    (zero outside the 3-tap band), which folds the conv's W zero-padding into an
    ordinary lane-dense matmul.
    """
    c_out, c_in = w_pt.shape[0], w_pt.shape[1]
    w_hwio = jnp.transpose(w_pt[:, :, 0, :, :], (2, 3, 1, 0))   # (kh, kw, ci, co)
    place = np.zeros((3, w_dim, w_dim), np.float32)             # (kw, w_in, w_out)
    for kw in range(3):
        for w_out in range(w_dim):
            w_in = w_out + kw - 1
            if 0 <= w_in < w_dim:
                place[kw, w_in, w_out] = 1.0
    bands = jnp.einsum("kab,hkio->haibo", jnp.asarray(place), w_hwio)
    return bands.reshape(3, w_dim * c_in, w_dim * c_out)


def _finalize_bn(partial_stats, count, w_dim, c, gamma, beta):
    """Reduce per-tile partials to folded per-channel (scale, shift), tiled to (1, W*C)."""
    s = jnp.sum(partial_stats, axis=0)              # (2, WC) f32
    ch = s.reshape(2, w_dim, c).sum(axis=1)         # (2, C)
    mean = ch[0] / count
    # One-pass biased variance; accumulation stayed in f32 end-to-end (guard cancellation).
    var = jnp.maximum(ch[1] / count - mean * mean, 0.0)
    scale_c = gamma * jax.lax.rsqrt(var + BN_EPS)
    shift_c = beta - mean * scale_c
    scale = jnp.tile(scale_c, (w_dim,)).reshape(1, w_dim * c)
    shift = jnp.tile(shift_c, (w_dim,)).reshape(1, w_dim * c)
    return scale.astype(jnp.float32), shift.astype(jnp.float32)


def _choose_tile_b(b, row_bytes, budget=2 << 20):
    """Largest divisor of b whose tile fits `budget`, preferring >=2 grid steps."""
    best = 1
    for d in range(1, b + 1):
        if b % d == 0 and d * row_bytes <= budget and (d < b or b == 1):
            best = d
    return best


def _vmem_limit_bytes(tb, h, wc, compute_dtype):
    """Size the VMEM request to the tiled working set; never the whole v7x budget."""
    cd = jnp.dtype(compute_dtype).itemsize
    tile = tb * h * wc
    est = (2 * 2 * tile * 4          # double-buffered f32 tiles (in + out)
           + 2 * 2 * tile * cd       # double-buffered compute-dtype tiles
           + tb * (h + 2) * wc * 4   # halo scratch
           + 3 * wc * wc * cd        # band matrices
           + 4 * tile * 4)           # in-kernel f32 temporaries
    return int(min(48 << 20, max(16 << 20, 4 * est)))


# ---------------------------------------------------------------------------- forward
@functools.partial(jax.jit, static_argnames=("compute_dtype",))
def iresidual_forward(x_ncdhw, params, *, compute_dtype=jnp.bfloat16):
    """x_ncdhw: (N, C, D, H, W) float32 -> (N, C, D, H, W) float32."""
    w1, w2, g1, b1, g2, b2 = params
    n, c, d, h, w = x_ncdhw.shape
    b = n * d
    wc = w * c

    # NCDHW -> channels-last (B, H, W*C); lane dim = W*C => lane-dense slabs.
    # TODO(synk): if the surrounding model kept activations channels-last, this HBM
    # round-trip transpose (and the one on the way out) would disappear entirely.
    x = jnp.transpose(x_ncdhw, (0, 2, 3, 4, 1)).reshape(b, h, wc)

    bands1 = _conv_weight_to_bands(w1, w).astype(compute_dtype)
    bands2 = _conv_weight_to_bands(w2, w).astype(compute_dtype)

    tb = _choose_tile_b(b, h * wc * 4)
    n_tiles = b // tb
    count = b * h * w  # elements per channel for the batch statistics

    tile_spec = pl.BlockSpec((tb, h, wc), lambda i: (i, 0, 0))
    vec_spec = pl.BlockSpec((1, wc), lambda i: (0, 0))
    band_spec = pl.BlockSpec((3, wc, wc), lambda i: (0, 0, 0))
    stats_spec = pl.BlockSpec((1, 2, wc), lambda i: (i, 0, 0))
    stats_shape = jax.ShapeDtypeStruct((n_tiles, 2, wc), jnp.float32)
    scratch = [pltpu.VMEM((tb, h + 2, wc), jnp.float32)]
    cparams = pltpu.CompilerParams(
        dimension_semantics=("parallel",),
        vmem_limit_bytes=_vmem_limit_bytes(tb, h, wc, compute_dtype))

    # Sweep 1: conv1 + BN1 partial statistics.
    y1, st1 = pl.pallas_call(
        _conv_stats_kernel,
        grid=(n_tiles,),
        in_specs=[tile_spec, band_spec],
        out_specs=(tile_spec, stats_spec),
        out_shape=(jax.ShapeDtypeStruct((b, h, wc), compute_dtype), stats_shape),
        scratch_shapes=scratch,
        compiler_params=cparams,
    )(x, bands1)
    scale1, shift1 = _finalize_bn(st1, count, w, c, g1, b1)

    # Sweep 2: BN1 + LeakyReLU + conv2 + BN2 partial statistics.
    y2, st2 = pl.pallas_call(
        _bn_conv_stats_kernel,
        grid=(n_tiles,),
        in_specs=[tile_spec, vec_spec, vec_spec, band_spec],
        out_specs=(tile_spec, stats_spec),
        out_shape=(jax.ShapeDtypeStruct((b, h, wc), compute_dtype), stats_shape),
        scratch_shapes=scratch,
        compiler_params=cparams,
    )(y1, scale1, shift1, bands2)
    scale2, shift2 = _finalize_bn(st2, count, w, c, g2, b2)

    # Sweep 3: BN2 + LeakyReLU + residual add (f32).
    out = pl.pallas_call(
        _bn_residual_kernel,
        grid=(n_tiles,),
        in_specs=[tile_spec, tile_spec, vec_spec, vec_spec],
        out_specs=tile_spec,
        out_shape=jax.ShapeDtypeStruct((b, h, wc), x.dtype),
        compiler_params=cparams,
    )(y2, x, scale2, shift2)

    return out.reshape(n, d, h, w, c).transpose(0, 4, 1, 2, 3)


# ------------------------------------------------------------------- params / reference
def make_params(key, c):
    """Deterministic synthetic parameters matching the module's shapes/init.

    Conv3d weight (C, C, 1, 3, 3), bias=False.  IBatchNorm3d: weight (gamma) filled
    with bn_weight_init=1.0, bias (beta) zero-init.  Kept as generic arrays so
    nontrivial gamma/beta would also work.
    """
    k1, k2 = jax.random.split(key)
    w1 = jax.random.normal(k1, (c, c, 1, 3, 3), jnp.float32) * 0.1
    w2 = jax.random.normal(k2, (c, c, 1, 3, 3), jnp.float32) * 0.1
    gamma = jnp.ones((c,), jnp.float32)
    beta = jnp.zeros((c,), jnp.float32)
    return (w1, w2, gamma, beta, gamma, beta)


def reference_forward(x_ncdhw, params):
    """Pure-JAX reference of the same forward pass (for correctness check)."""
    w1, w2, g1, b1, g2, b2 = params
    n, c, d, h, w = x_ncdhw.shape
    x = jnp.transpose(x_ncdhw, (0, 2, 3, 4, 1)).reshape(n * d, h, w, c)

    def conv(x_nhwc, w_pt):
        w_hwio = jnp.transpose(w_pt[:, :, 0, :, :], (2, 3, 1, 0))  # (kh, kw, ci, co)
        return jax.lax.conv_general_dilated(
            x_nhwc, w_hwio, window_strides=(1, 1), padding=((1, 1), (1, 1)),
            dimension_numbers=("NHWC", "HWIO", "NHWC"))

    def bn_lrelu(y, g, bb):
        mean = y.mean(axis=(0, 1, 2))
        var = ((y - mean) ** 2).mean(axis=(0, 1, 2))  # biased (training-mode) variance
        y = (y - mean) * jax.lax.rsqrt(var + BN_EPS) * g + bb
        return jnp.where(y > 0, y, NEG_SLOPE * y)

    y = bn_lrelu(conv(x, w1), g1, b1)
    y = bn_lrelu(conv(y, w2), g2, b2)
    out = y + x
    return out.reshape(n, d, h, w, c).transpose(0, 4, 1, 2, 3)


if __name__ == "__main__":
    key = jax.random.PRNGKey(0)
    kx, kp = jax.random.split(key)

    N, C, D, H, W = 2, 8, 4, 16, 16        # small NCDHW input; W*C = 128 (lane-dense)
    x = jax.random.normal(kx, (N, C, D, H, W), jnp.float32)
    params = make_params(kp, C)

    ref = jax.block_until_ready(reference_forward(x, params))

    # Strict check with f32 matmuls.
    out_f32 = jax.block_until_ready(
        iresidual_forward(x, params, compute_dtype=jnp.float32))
    assert out_f32.shape == (N, C, D, H, W)
    assert jnp.allclose(out_f32, ref, rtol=1e-4, atol=1e-4), (
        f"f32 max abs err {jnp.max(jnp.abs(out_f32 - ref))}")

    # Default bf16-matmul / f32-accumulate path: looser tolerance.
    out_bf16 = jax.block_until_ready(
        iresidual_forward(x, params, compute_dtype=jnp.bfloat16))
    assert out_bf16.shape == (N, C, D, H, W)
    assert jnp.allclose(out_bf16, ref, rtol=5e-2, atol=5e-2), (
        f"bf16 max abs err {jnp.max(jnp.abs(out_bf16 - ref))}")

    print("KERNEL_OK")
</pallas_src>

<mosaic_0001>
module attributes {stable_mosaic.version = 11 : i64} {
  func.func @_conv_stats_kernel(%arg0: i32, %arg1: memref<4x16x128xf32, #tpu.memory_space<vmem>>, %arg2: memref<3x128x128xf32, #tpu.memory_space<vmem>>, %arg3: memref<4x16x128xf32, #tpu.memory_space<vmem>>, %arg4: memref<1x2x128xf32, #tpu.memory_space<vmem>>, %arg5: memref<4x18x128xf32, #tpu.memory_space<vmem>>) attributes {dimension_semantics = [#tpu.dimension_semantics<parallel>], iteration_bounds = array<i64: 2>, scalar_prefetch = 0 : i64, scratch_operands = 1 : i64, tpu.core_type = #tpu.core_type<tc>, window_params = [{transform_indices = @transform_0, window_bounds = array<i64: 4, 16, 128>}, {pipeline_mode = #tpu.pipeline_mode<synchronous>, transform_indices = @transform_1, window_bounds = array<i64: 3, 128, 128>}, {transform_indices = @transform_2, window_bounds = array<i64: 4, 16, 128>}, {transform_indices = @transform_3, window_bounds = array<i64: 1, 2, 128>}]} {
    %c0 = arith.constant 0 : index
    %c0_0 = arith.constant 0 : index
    %c0_1 = arith.constant 0 : index
    %0 = vector.load %arg1[%c0, %c0_0, %c0_1] : memref<4x16x128xf32, #tpu.memory_space<vmem>>, vector<4x16x128xf32>
    %cst = arith.constant 0.000000e+00 : f32
    %1 = vector.broadcast %cst : f32 to vector<4x1x128xf32>
    %c0_2 = arith.constant 0 : index
    %c0_3 = arith.constant 0 : index
    %c0_4 = arith.constant 0 : index
    %2 = vector.load %arg5[%c0_2, %c0_3, %c0_4] : memref<4x18x128xf32, #tpu.memory_space<vmem>>, vector<4x1x128xf32>
    tpu.vector_store %arg5[%c0_2, %c0_3, %c0_4], %1 {strides = array<i32>} : memref<4x18x128xf32, #tpu.memory_space<vmem>>, vector<4x1x128xf32>,
    %c0_5 = arith.constant 0 : index
    %c17 = arith.constant 17 : index
    %c0_6 = arith.constant 0 : index
    %3 = vector.load %arg5[%c0_5, %c17, %c0_6] : memref<4x18x128xf32, #tpu.memory_space<vmem>>, vector<4x1x128xf32>
    tpu.vector_store %arg5[%c0_5, %c17, %c0_6], %1 {strides = array<i32>} : memref<4x18x128xf32, #tpu.memory_space<vmem>>, vector<4x1x128xf32>,
    %c0_7 = arith.constant 0 : index
    %c1 = arith.constant 1 : index
    %c0_8 = arith.constant 0 : index
    %4 = vector.load %arg5[%c0_7, %c1, %c0_8] : memref<4x18x128xf32, #tpu.memory_space<vmem>>, vector<4x16x128xf32>
    tpu.vector_store %arg5[%c0_7, %c1, %c0_8], %0 {strides = array<i32>} : memref<4x18x128xf32, #tpu.memory_space<vmem>>, vector<4x16x128xf32>,
    %c0_9 = arith.constant 0 : index
    %c0_10 = arith.constant 0 : index
    %c0_11 = arith.constant 0 : index
    %5 = vector.load %arg5[%c0_9, %c0_10, %c0_11] : memref<4x18x128xf32, #tpu.memory_space<vmem>>, vector<4x16x128xf32>
    %6 = vector.shape_cast %5 : vector<4x16x128xf32> to vector<64x128xf32>
    %c0_12 = arith.constant 0 : index
    %c0_13 = arith.constant 0 : index
    %c0_14 = arith.constant 0 : index
    %7 = vector.load %arg2[%c0_12, %c0_13, %c0_14] : memref<3x128x128xf32, #tpu.memory_space<vmem>>, vector<1x128x128xf32>
    %8 = vector.shape_cast %7 : vector<1x128x128xf32> to vector<128x128xf32>
    %cst_15 = arith.constant dense<0.000000e+00> : vector<64x128xf32>
    %9 = tpu.matmul %6, %8, %cst_15 {dimension_numbers = #tpu.dot_dimension_numbers<[1], [0], [0], [1], [0, 0, 1, 1], [], []>} : vector<64x128xf32>, vector<128x128xf32>, vector<64x128xf32> -> vector<64x128xf32>
    %c0_16 = arith.constant 0 : index
    %c1_17 = arith.constant 1 : index
    %c0_18 = arith.constant 0 : index
    %10 = vector.load %arg5[%c0_16, %c1_17, %c0_18] : memref<4x18x128xf32, #tpu.memory_space<vmem>>, vector<4x16x128xf32>
    %11 = vector.shape_cast %10 : vector<4x16x128xf32> to vector<64x128xf32>
    %c1_19 = arith.constant 1 : index
    %c0_20 = arith.constant 0 : index
    %c0_21 = arith.constant 0 : index
    %12 = vector.load %arg2[%c1_19, %c0_20, %c0_21] : memref<3x128x128xf32, #tpu.memory_space<vmem>>, vector<1x128x128xf32>
    %13 = vector.shape_cast %12 : vector<1x128x128xf32> to vector<128x128xf32>
    %cst_22 = arith.constant dense<0.000000e+00> : vector<64x128xf32>
    %14 = tpu.matmul %11, %13, %cst_22 {dimension_numbers = #tpu.dot_dimension_numbers<[1], [0], [0], [1], [0, 0, 1, 1], [], []>} : vector<64x128xf32>, vector<128x128xf32>, vector<64x128xf32> -> vector<64x128xf32>
    %15 = arith.addf %9, %14 : vector<64x128xf32>
    %c0_23 = arith.constant 0 : index
    %c2 = arith.constant 2 : index
    %c0_24 = arith.constant 0 : index
    %16 = vector.load %arg5[%c0_23, %c2, %c0_24] : memref<4x18x128xf32, #tpu.memory_space<vmem>>, vector<4x16x128xf32>
    %17 = vector.shape_cast %16 : vector<4x16x128xf32> to vector<64x128xf32>
    %c2_25 = arith.constant 2 : index
    %c0_26 = arith.constant 0 : index
    %c0_27 = arith.constant 0 : index
    %18 = vector.load %arg2[%c2_25, %c0_26, %c0_27] : memref<3x128x128xf32, #tpu.memory_space<vmem>>, vector<1x128x128xf32>
    %19 = vector.shape_cast %18 : vector<1x128x128xf32> to vector<128x128xf32>
    %cst_28 = arith.constant dense<0.000000e+00> : vector<64x128xf32>
    %20 = tpu.matmul %17, %19, %cst_28 {dimension_numbers = #tpu.dot_dimension_numbers<[1], [0], [0], [1], [0, 0, 1, 1], [], []>} : vector<64x128xf32>, vector<128x128xf32>, vector<64x128xf32> -> vector<64x128xf32>
    %21 = arith.addf %15, %20 : vector<64x128xf32>
    %cst_29 = arith.constant dense<0.000000e+00> : vector<128xf32>
    %22 = vector.multi_reduction <add>, %21, %cst_29 [0] : vector<64x128xf32> to vector<128xf32>
    %23 = vector.shape_cast %22 : vector<128xf32> to vector<1x128xf32>
    %24 = arith.mulf %21, %21 : vector<64x128xf32>
    %cst_30 = arith.constant dense<0.000000e+00> : vector<128xf32>
    %25 = vector.multi_reduction <add>, %24, %cst_30 [0] : vector<64x128xf32> to vector<128xf32>
    %26 = vector.shape_cast %25 : vector<128xf32> to vector<1x128xf32>
    %c0_31 = arith.constant 0 : index
    %c0_32 = arith.constant 0 : index
    %c0_33 = arith.constant 0 : index
    %27 = vector.load %arg4[%c0_31, %c0_32, %c0_33] : memref<1x2x128xf32, #tpu.memory_space<vmem>>, vector<1x1x128xf32>
    %28 = vector.shape_cast %27 : vector<1x1x128xf32> to vector<1x128xf32>
    %29 = vector.shape_cast %23 : vector<1x128xf32> to vector<1x1x128xf32>
    tpu.vector_store %arg4[%c0_31, %c0_32, %c0_33], %29 {strides = array<i32>} : memref<1x2x128xf32, #tpu.memory_space<vmem>>, vector<1x1x128xf32>,
    %c0_34 = arith.constant 0 : index
    %c1_35 = arith.constant 1 : index
    %c0_36 = arith.constant 0 : index
    %30 = vector.load %arg4[%c0_34, %c1_35, %c0_36] : memref<1x2x128xf32, #tpu.memory_space<vmem>>, vector<1x1x128xf32>
    %31 = vector.shape_cast %30 : vector<1x1x128xf32> to vector<1x128xf32>
    %32 = vector.shape_cast %26 : vector<1x128xf32> to vector<1x1x128xf32>
    tpu.vector_store %arg4[%c0_34, %c1_35, %c0_36], %32 {strides = array<i32>} : memref<1x2x128xf32, #tpu.memory_space<vmem>>, vector<1x1x128xf32>,
    %33 = vector.shape_cast %21 : vector<64x128xf32> to vector<4x16x128xf32>
    %c0_37 = arith.constant 0 : index
    %c0_38 = arith.constant 0 : index
    %c0_39 = arith.constant 0 : index
    %34 = vector.load %arg3[%c0_37, %c0_38, %c0_39] : memref<4x16x128xf32, #tpu.memory_space<vmem>>, vector<4x16x128xf32>
    tpu.vector_store %arg3[%c0_37, %c0_38, %c0_39], %33 {strides = array<i32>} : memref<4x16x128xf32, #tpu.memory_space<vmem>>, vector<4x16x128xf32>,
    return
  }
  func.func @transform_0(%arg0: i32) -> (i32, i32, i32) {
    %c0_i32 = arith.constant 0 : i32
    %c0_i32_0 = arith.constant 0 : i32
    %c0_i32_1 = arith.constant 0 : i32
    return %arg0, %c0_i32, %c0_i32_0 : i32, i32, i32
  }
  func.func @transform_1(%arg0: i32) -> (i32, i32, i32) {
    %c0_i32 = arith.constant 0 : i32
    %c0_i32_0 = arith.constant 0 : i32
    %c0_i32_1 = arith.constant 0 : i32
    %c0_i32_2 = arith.constant 0 : i32
    return %c0_i32, %c0_i32_0, %c0_i32_1 : i32, i32, i32
  }
  func.func @transform_2(%arg0: i32) -> (i32, i32, i32) {
    %c0_i32 = arith.constant 0 : i32
    %c0_i32_0 = arith.constant 0 : i32
    %c0_i32_1 = arith.constant 0 : i32
    return %arg0, %c0_i32, %c0_i32_0 : i32, i32, i32
  }
  func.func @transform_3(%arg0: i32) -> (i32, i32, i32) {
    %c0_i32 = arith.constant 0 : i32
    %c0_i32_0 = arith.constant 0 : i32
    %c0_i32_1 = arith.constant 0 : i32
    return %arg0, %c0_i32, %c0_i32_0 : i32, i32, i32
  }
}

module attributes {stable_mosaic.version = 11 : i64} {
  func.func @_bn_conv_stats_kernel(%arg0: i32, %arg1: memref<4x16x128xf32, #tpu.memory_space<vmem>>, %arg2: memref<1x128xf32, #tpu.memory_space<vmem>>, %arg3: memref<1x128xf32, #tpu.memory_space<vmem>>, %arg4: memref<3x128x128xf32, #tpu.memory_space<vmem>>, %arg5: memref<4x16x128xf32, #tpu.memory_space<vmem>>, %arg6: memref<1x2x128xf32, #tpu.memory_space<vmem>>, %arg7: memref<4x18x128xf32, #tpu.memory_space<vmem>>) attributes {dimension_semantics = [#tpu.dimension_semantics<parallel>], iteration_bounds = array<i64: 2>, scalar_prefetch = 0 : i64, scratch_operands = 1 : i64, tpu.core_type = #tpu.core_type<tc>, window_params = [{transform_indices = @transform_0, window_bounds = array<i64: 4, 16, 128>}, {pipeline_mode = #tpu.pipeline_mode<synchronous>, transform_indices = @transform_1, window_bounds = array<i64: 1, 128>}, {pipeline_mode = #tpu.pipeline_mode<synchronous>, transform_indices = @transform_2, window_bounds = array<i64: 1, 128>}, {pipeline_mode = #tpu.pipeline_mode<synchronous>, transform_indices = @transform_3, window_bounds = array<i64: 3, 128, 128>}, {transform_indices = @transform_4, window_bounds = array<i64: 4, 16, 128>}, {transform_indices = @transform_5, window_bounds = array<i64: 1, 2, 128>}]} {
    %c0 = arith.constant 0 : index
    %c0_0 = arith.constant 0 : index
    %c0_1 = arith.constant 0 : index
    %0 = vector.load %arg1[%c0, %c0_0, %c0_1] : memref<4x16x128xf32, #tpu.memory_space<vmem>>, vector<4x16x128xf32>
    %c0_2 = arith.constant 0 : index
    %c0_3 = arith.constant 0 : index
    %1 = vector.load %arg2[%c0_2, %c0_3] : memref<1x128xf32, #tpu.memory_space<vmem>>, vector<1x128xf32>
    %2 = vector.shape_cast %1 : vector<1x128xf32> to vector<1x1x128xf32>
    %3 = vector.broadcast %2 : vector<1x1x128xf32> to vector<4x16x128xf32>
    %4 = arith.mulf %0, %3 : vector<4x16x128xf32>
    %c0_4 = arith.constant 0 : index
    %c0_5 = arith.constant 0 : index
    %5 = vector.load %arg3[%c0_4, %c0_5] : memref<1x128xf32, #tpu.memory_space<vmem>>, vector<1x128xf32>
    %6 = vector.shape_cast %5 : vector<1x128xf32> to vector<1x1x128xf32>
    %7 = vector.broadcast %6 : vector<1x1x128xf32> to vector<4x16x128xf32>
    %8 = arith.addf %4, %7 : vector<4x16x128xf32>
    %cst = arith.constant 0.000000e+00 : f32
    %9 = vector.broadcast %cst : f32 to vector<4x16x128xf32>
    %10 = arith.cmpf ogt, %8, %9 : vector<4x16x128xf32>
    %cst_6 = arith.constant 0.00999999977 : f32
    %11 = vector.broadcast %cst_6 : f32 to vector<4x16x128xf32>
    %12 = arith.mulf %11, %8 : vector<4x16x128xf32>
    %13 = arith.select %10, %8, %12 : vector<4x16x128xi1>, vector<4x16x128xf32>
    %cst_7 = arith.constant 0.000000e+00 : f32
    %14 = vector.broadcast %cst_7 : f32 to vector<4x1x128xf32>
    %c0_8 = arith.constant 0 : index
    %c0_9 = arith.constant 0 : index
    %c0_10 = arith.constant 0 : index
    %15 = vector.load %arg7[%c0_8, %c0_9, %c0_10] : memref<4x18x128xf32, #tpu.memory_space<vmem>>, vector<4x1x128xf32>
    tpu.vector_store %arg7[%c0_8, %c0_9, %c0_10], %14 {strides = array<i32>} : memref<4x18x128xf32, #tpu.memory_space<vmem>>, vector<4x1x128xf32>,
    %c0_11 = arith.constant 0 : index
    %c17 = arith.constant 17 : index
    %c0_12 = arith.constant 0 : index
    %16 = vector.load %arg7[%c0_11, %c17, %c0_12] : memref<4x18x128xf32, #tpu.memory_space<vmem>>, vector<4x1x128xf32>
    tpu.vector_store %arg7[%c0_11, %c17, %c0_12], %14 {strides = array<i32>} : memref<4x18x128xf32, #tpu.memory_space<vmem>>, vector<4x1x128xf32>,
    %c0_13 = arith.constant 0 : index
    %c1 = arith.constant 1 : index
    %c0_14 = arith.constant 0 : index
    %17 = vector.load %arg7[%c0_13, %c1, %c0_14] : memref<4x18x128xf32, #tpu.memory_space<vmem>>, vector<4x16x128xf32>
    tpu.vector_store %arg7[%c0_13, %c1, %c0_14], %13 {strides = array<i32>} : memref<4x18x128xf32, #tpu.memory_space<vmem>>, vector<4x16x128xf32>,
    %c0_15 = arith.constant 0 : index
    %c0_16 = arith.constant 0 : index
    %c0_17 = arith.constant 0 : index
    %18 = vector.load %arg7[%c0_15, %c0_16, %c0_17] : memref<4x18x128xf32, #tpu.memory_space<vmem>>, vector<4x16x128xf32>
    %19 = vector.shape_cast %18 : vector<4x16x128xf32> to vector<64x128xf32>
    %c0_18 = arith.constant 0 : index
    %c0_19 = arith.constant 0 : index
    %c0_20 = arith.constant 0 : index
    %20 = vector.load %arg4[%c0_18, %c0_19, %c0_20] : memref<3x128x128xf32, #tpu.memory_space<vmem>>, vector<1x128x128xf32>
    %21 = vector.shape_cast %20 : vector<1x128x128xf32> to vector<128x128xf32>
    %cst_21 = arith.constant dense<0.000000e+00> : vector<64x128xf32>
    %22 = tpu.matmul %19, %21, %cst_21 {dimension_numbers = #tpu.dot_dimension_numbers<[1], [0], [0], [1], [0, 0, 1, 1], [], []>} : vector<64x128xf32>, vector<128x128xf32>, vector<64x128xf32> -> vector<64x128xf32>
    %c0_22 = arith.constant 0 : index
    %c1_23 = arith.constant 1 : index
    %c0_24 = arith.constant 0 : index
    %23 = vector.load %arg7[%c0_22, %c1_23, %c0_24] : memref<4x18x128xf32, #tpu.memory_space<vmem>>, vector<4x16x128xf32>
    %24 = vector.shape_cast %23 : vector<4x16x128xf32> to vector<64x128xf32>
    %c1_25 = arith.constant 1 : index
    %c0_26 = arith.constant 0 : index
    %c0_27 = arith.constant 0 : index
    %25 = vector.load %arg4[%c1_25, %c0_26, %c0_27] : memref<3x128x128xf32, #tpu.memory_space<vmem>>, vector<1x128x128xf32>
    %26 = vector.shape_cast %25 : vector<1x128x128xf32> to vector<128x128xf32>
    %cst_28 = arith.constant dense<0.000000e+00> : vector<64x128xf32>
    %27 = tpu.matmul %24, %26, %cst_28 {dimension_numbers = #tpu.dot_dimension_numbers<[1], [0], [0], [1], [0, 0, 1, 1], [], []>} : vector<64x128xf32>, vector<128x128xf32>, vector<64x128xf32> -> vector<64x128xf32>
    %28 = arith.addf %22, %27 : vector<64x128xf32>
    %c0_29 = arith.constant 0 : index
    %c2 = arith.constant 2 : index
    %c0_30 = arith.constant 0 : index
    %29 = vector.load %arg7[%c0_29, %c2, %c0_30] : memref<4x18x128xf32, #tpu.memory_space<vmem>>, vector<4x16x128xf32>
    %30 = vector.shape_cast %29 : vector<4x16x128xf32> to vector<64x128xf32>
    %c2_31 = arith.constant 2 : index
    %c0_32 = arith.constant 0 : index
    %c0_33 = arith.constant 0 : index
    %31 = vector.load %arg4[%c2_31, %c0_32, %c0_33] : memref<3x128x128xf32, #tpu.memory_space<vmem>>, vector<1x128x128xf32>
    %32 = vector.shape_cast %31 : vector<1x128x128xf32> to vector<128x128xf32>
    %cst_34 = arith.constant dense<0.000000e+00> : vector<64x128xf32>
    %33 = tpu.matmul %30, %32, %cst_34 {dimension_numbers = #tpu.dot_dimension_numbers<[1], [0], [0], [1], [0, 0, 1, 1], [], []>} : vector<64x128xf32>, vector<128x128xf32>, vector<64x128xf32> -> vector<64x128xf32>
    %34 = arith.addf %28, %33 : vector<64x128xf32>
    %cst_35 = arith.constant dense<0.000000e+00> : vector<128xf32>
    %35 = vector.multi_reduction <add>, %34, %cst_35 [0] : vector<64x128xf32> to vector<128xf32>
    %36 = vector.shape_cast %35 : vector<128xf32> to vector<1x128xf32>
    %37 = arith.mulf %34, %34 : vector<64x128xf32>
    %cst_36 = arith.constant dense<0.000000e+00> : vector<128xf32>
    %38 = vector.multi_reduction <add>, %37, %cst_36 [0] : vector<64x128xf32> to vector<128xf32>
    %39 = vector.shape_cast %38 : vector<128xf32> to vector<1x128xf32>
    %c0_37 = arith.constant 0 : index
    %c0_38 = arith.constant 0 : index
    %c0_39 = arith.constant 0 : index
    %40 = vector.load %arg6[%c0_37, %c0_38, %c0_39] : memref<1x2x128xf32, #tpu.memory_space<vmem>>, vector<1x1x128xf32>
    %41 = vector.shape_cast %40 : vector<1x1x128xf32> to vector<1x128xf32>
    %42 = vector.shape_cast %36 : vector<1x128xf32> to vector<1x1x128xf32>
    tpu.vector_store %arg6[%c0_37, %c0_38, %c0_39], %42 {strides = array<i32>} : memref<1x2x128xf32, #tpu.memory_space<vmem>>, vector<1x1x128xf32>,
    %c0_40 = arith.constant 0 : index
    %c1_41 = arith.constant 1 : index
    %c0_42 = arith.constant 0 : index
    %43 = vector.load %arg6[%c0_40, %c1_41, %c0_42] : memref<1x2x128xf32, #tpu.memory_space<vmem>>, vector<1x1x128xf32>
    %44 = vector.shape_cast %43 : vector<1x1x128xf32> to vector<1x128xf32>
    %45 = vector.shape_cast %39 : vector<1x128xf32> to vector<1x1x128xf32>
    tpu.vector_store %arg6[%c0_40, %c1_41, %c0_42], %45 {strides = array<i32>} : memref<1x2x128xf32, #tpu.memory_space<vmem>>, vector<1x1x128xf32>,
    %46 = vector.shape_cast %34 : vector<64x128xf32> to vector<4x16x128xf32>
    %c0_43 = arith.constant 0 : index
    %c0_44 = arith.constant 0 : index
    %c0_45 = arith.constant 0 : index
    %47 = vector.load %arg5[%c0_43, %c0_44, %c0_45] : memref<4x16x128xf32, #tpu.memory_space<vmem>>, vector<4x16x128xf32>
    tpu.vector_store %arg5[%c0_43, %c0_44, %c0_45], %46 {strides = array<i32>} : memref<4x16x128xf32, #tpu.memory_space<vmem>>, vector<4x16x128xf32>,
    return
  }
  func.func @transform_0(%arg0: i32) -> (i32, i32, i32) {
    %c0_i32 = arith.constant 0 : i32
    %c0_i32_0 = arith.constant 0 : i32
    %c0_i32_1 = arith.constant 0 : i32
    return %arg0, %c0_i32, %c0_i32_0 : i32, i32, i32
  }
  func.func @transform_1(%arg0: i32) -> (i32, i32) {
    %c0_i32 = arith.constant 0 : i32
    %c0_i32_0 = arith.constant 0 : i32
    %c0_i32_1 = arith.constant 0 : i32
    return %c0_i32, %c0_i32_0 : i32, i32
  }
  func.func @transform_2(%arg0: i32) -> (i32, i32) {
    %c0_i32 = arith.constant 0 : i32
    %c0_i32_0 = arith.constant 0 : i32
    %c0_i32_1 = arith.constant 0 : i32
    return %c0_i32, %c0_i32_0 : i32, i32
  }
  func.func @transform_3(%arg0: i32) -> (i32, i32, i32) {
    %c0_i32 = arith.constant 0 : i32
    %c0_i32_0 = arith.constant 0 : i32
    %c0_i32_1 = arith.constant 0 : i32
    %c0_i32_2 = arith.constant 0 : i32
    return %c0_i32, %c0_i32_0, %c0_i32_1 : i32, i32, i32
  }
  func.func @transform_4(%arg0: i32) -> (i32, i32, i32) {
    %c0_i32 = arith.constant 0 : i32
    %c0_i32_0 = arith.constant 0 : i32
    %c0_i32_1 = arith.constant 0 : i32
    return %arg0, %c0_i32, %c0_i32_0 : i32, i32, i32
  }
  func.func @transform_5(%arg0: i32) -> (i32, i32, i32) {
    %c0_i32 = arith.constant 0 : i32
    %c0_i32_0 = arith.constant 0 : i32
    %c0_i32_1 = arith.constant 0 : i32
    return %arg0, %c0_i32, %c0_i32_0 : i32, i32, i32
  }
}

module attributes {stable_mosaic.version = 11 : i64} {
  func.func @_bn_residual_kernel(%arg0: i32, %arg1: memref<4x16x128xf32, #tpu.memory_space<vmem>>, %arg2: memref<4x16x128xf32, #tpu.memory_space<vmem>>, %arg3: memref<1x128xf32, #tpu.memory_space<vmem>>, %arg4: memref<1x128xf32, #tpu.memory_space<vmem>>, %arg5: memref<4x16x128xf32, #tpu.memory_space<vmem>>) attributes {dimension_semantics = [#tpu.dimension_semantics<parallel>], iteration_bounds = array<i64: 2>, scalar_prefetch = 0 : i64, scratch_operands = 0 : i64, tpu.core_type = #tpu.core_type<tc>, window_params = [{transform_indices = @transform_0, window_bounds = array<i64: 4, 16, 128>}, {transform_indices = @transform_1, window_bounds = array<i64: 4, 16, 128>}, {pipeline_mode = #tpu.pipeline_mode<synchronous>, transform_indices = @transform_2, window_bounds = array<i64: 1, 128>}, {pipeline_mode = #tpu.pipeline_mode<synchronous>, transform_indices = @transform_3, window_bounds = array<i64: 1, 128>}, {transform_indices = @transform_4, window_bounds = array<i64: 4, 16, 128>}]} {
    %c0 = arith.constant 0 : index
    %c0_0 = arith.constant 0 : index
    %c0_1 = arith.constant 0 : index
    %0 = vector.load %arg1[%c0, %c0_0, %c0_1] : memref<4x16x128xf32, #tpu.memory_space<vmem>>, vector<4x16x128xf32>
    %c0_2 = arith.constant 0 : index
    %c0_3 = arith.constant 0 : index
    %1 = vector.load %arg3[%c0_2, %c0_3] : memref<1x128xf32, #tpu.memory_space<vmem>>, vector<1x128xf32>
    %2 = vector.shape_cast %1 : vector<1x128xf32> to vector<1x1x128xf32>
    %3 = vector.broadcast %2 : vector<1x1x128xf32> to vector<4x16x128xf32>
    %4 = arith.mulf %0, %3 : vector<4x16x128xf32>
    %c0_4 = arith.constant 0 : index
    %c0_5 = arith.constant 0 : index
    %5 = vector.load %arg4[%c0_4, %c0_5] : memref<1x128xf32, #tpu.memory_space<vmem>>, vector<1x128xf32>
    %6 = vector.shape_cast %5 : vector<1x128xf32> to vector<1x1x128xf32>
    %7 = vector.broadcast %6 : vector<1x1x128xf32> to vector<4x16x128xf32>
    %8 = arith.addf %4, %7 : vector<4x16x128xf32>
    %cst = arith.constant 0.000000e+00 : f32
    %9 = vector.broadcast %cst : f32 to vector<4x16x128xf32>
    %10 = arith.cmpf ogt, %8, %9 : vector<4x16x128xf32>
    %cst_6 = arith.constant 0.00999999977 : f32
    %11 = vector.broadcast %cst_6 : f32 to vector<4x16x128xf32>
    %12 = arith.mulf %11, %8 : vector<4x16x128xf32>
    %13 = arith.select %10, %8, %12 : vector<4x16x128xi1>, vector<4x16x128xf32>
    %c0_7 = arith.constant 0 : index
    %c0_8 = arith.constant 0 : index
    %c0_9 = arith.constant 0 : index
    %14 = vector.load %arg2[%c0_7, %c0_8, %c0_9] : memref<4x16x128xf32, #tpu.memory_space<vmem>>, vector<4x16x128xf32>
    %15 = arith.addf %13, %14 : vector<4x16x128xf32>
    %c0_10 = arith.constant 0 : index
    %c0_11 = arith.constant 0 : index
    %c0_12 = arith.constant 0 : index
    %16 = vector.load %arg5[%c0_10, %c0_11, %c0_12] : memref<4x16x128xf32, #tpu.memory_space<vmem>>, vector<4x16x128xf32>
    tpu.vector_store %arg5[%c0_10, %c0_11, %c0_12], %15 {strides = array<i32>} : memref<4x16x128xf32, #tpu.memory_space<vmem>>, vector<4x16x128xf32>,
    return
  }
  func.func @transform_0(%arg0: i32) -> (i32, i32, i32) {
    %c0_i32 = arith.constant 0 : i32
    %c0_i32_0 = arith.constant 0 : i32
    %c0_i32_1 = arith.constant 0 : i32
    return %arg0, %c0_i32, %c0_i32_0 : i32, i32, i32
  }
  func.func @transform_1(%arg0: i32) -> (i32, i32, i32) {
    %c0_i32 = arith.constant 0 : i32
    %c0_i32_0 = arith.constant 0 : i32
    %c0_i32_1 = arith.constant 0 : i32
    return %arg0, %c0_i32, %c0_i32_0 : i32, i32, i32
  }
  func.func @transform_2(%arg0: i32) -> (i32, i32) {
    %c0_i32 = arith.constant 0 : i32
    %c0_i32_0 = arith.constant 0 : i32
    %c0_i32_1 = arith.constant 0 : i32
    return %c0_i32, %c0_i32_0 : i32, i32
  }
  func.func @transform_3(%arg0: i32) -> (i32, i32) {
    %c0_i32 = arith.constant 0 : i32
    %c0_i32_0 = arith.constant 0 : i32
    %c0_i32_1 = arith.constant 0 : i32
    return %c0_i32, %c0_i32_0 : i32, i32
  }
  func.func @transform_4(%arg0: i32) -> (i32, i32, i32) {
    %c0_i32 = arith.constant 0 : i32
    %c0_i32_0 = arith.constant 0 : i32
    %c0_i32_1 = arith.constant 0 : i32
    return %arg0, %c0_i32, %c0_i32_0 : i32, i32, i32
  }
}

</mosaic_0001>

<llo_original>
// kernel: tile.23
$region0: #{tile.23}
  #allocation0 [shape = 's32[1]{0}', space=sflag, size = 0x4, scoped, tag = 'scoped memory for tile.23']
  %s0 = inlined_call_operand.vmem [shape: f32[8], index: 0, kind: input, shape index: {}]
  %s1 = inlined_call_operand.vmem [shape: f32[16,8], index: 1, kind: output, shape index: {}]
  // Predicated region
  $region2: #{tile.23} parent=0 // pred_check
    _
  $region3: #{tile.23} parent=0 // pred_check_branch
    %3 = sbr.rel (0) target = $region5
  $region4: #{tile.23} parent=0 // pred_region
    _
  $region5: #{tile.23} parent=0 // pred_fallthru
    _
  %v4 = vld [vmem:[%s0] ss:$0 sm:$0xff]
  %5 = vst [vmem:[%s1] sm:$0xff] %v4
  %s6 = scalar_lea.vmem %s1, 8
  %7 = vst [vmem:[%s6] sm:$0xff] %v4

// kernel: tile.24
$region0: #{tile.24}
  %s0 = inlined_call_operand.vmem [shape: f32[16,8], index: 0, kind: input, shape index: {}]
  %s1 = inlined_call_operand.vmem [shape: f32[1,128], index: 1, kind: output, shape index: {}]
  $region1: #{tile.24} parent=0
    #allocation0 [shape = 'u8[4096]{0}', space=vmem, size = 0x1000, scoped, tag = 'scoped mem for output reshape']
    %v2 = vld [vmem:[%s0] sm:$0x1]
    %vm3 = vcmask 64512
    %4 = vst.msk [vmem:[#allocation0] sm:$0x1] %vm3, %v2
    %s5 = scalar_lea.vmem %s0, 15
    %v6 = vld [vmem:[%s5] sm:$0x1]
    %7 = vrot.lane.b32.xlu0 %v6, 120
    %v8 = vpop.permute.xlu0 %7
    %vm9 = vcmask 1048512
    %10 = vst.msk [vmem:[#allocation0] sm:$0x1] %vm9, %v8
    %s11 = scalar_lea.vmem %s0, 14
    %v12 = vld [vmem:[%s11] sm:$0x1]
    %13 = vrot.lane.b32.xlu0 %v12, 112
    %v14 = vpop.permute.xlu0 %13
    %vm15 = vcmask 982912
    %16 = vst.msk [vmem:[#allocation0] sm:$0x1] %vm15, %v14
    %s17 = scalar_lea.vmem %s0, 13
    %v18 = vld [vmem:[%s17] sm:$0x1]
    %19 = vrot.lane.b32.xlu0 %v18, 104
    %v20 = vpop.permute.xlu0 %19
    %vm21 = vcmask 917312
    %22 = vst.msk [vmem:[#allocation0] sm:$0x1] %vm21, %v20
    %s23 = scalar_lea.vmem %s0, 12
    %v24 = vld [vmem:[%s23] sm:$0x1]
    %25 = vrot.lane.b32.xlu0 %v24, 96
    %v26 = vpop.permute.xlu0 %25
    %vm27 = vcmask 851712
    %28 = vst.msk [vmem:[#allocation0] sm:$0x1] %vm27, %v26
    %s29 = scalar_lea.vmem %s0, 11
    %v30 = vld [vmem:[%s29] sm:$0x1]
    %31 = vrot.lane.b32.xlu0 %v30, 88
    %v32 = vpop.permute.xlu0 %31
    %vm33 = vcmask 786112
    %34 = vst.msk [vmem:[#allocation0] sm:$0x1] %vm33, %v32
    %s35 = scalar_lea.vmem %s0, 10
    %v36 = vld [vmem:[%s35] sm:$0x1]
    %37 = vrot.lane.b32.xlu0 %v36, 80
    %v38 = vpop.permute.xlu0 %37
    %vm39 = vcmask 720512
    %40 = vst.msk [vmem:[#allocation0] sm:$0x1] %vm39, %v38
    %s41 = scalar_lea.vmem %s0, 9
    %v42 = vld [vmem:[%s41] sm:$0x1]
    %43 = vrot.lane.b32.xlu0 %v42, 72
    %v44 = vpop.permute.xlu0 %43
    %vm45 = vcmask 654912
    %46 = vst.msk [vmem:[#allocation0] sm:$0x1] %vm45, %v44
    %s47 = scalar_lea.vmem %s0, 8
    %v48 = vld [vmem:[%s47] sm:$0x1]
    %49 = vrot.lane.b32.xlu0 %v48, 64
    %v50 = vpop.permute.xlu0 %49
    %vm51 = vcmask 589312
    %52 = vst.msk [vmem:[#allocation0] sm:$0x1] %vm51, %v50
    %s53 = scalar_lea.vmem %s0, 7
    %v54 = vld [vmem:[%s53] sm:$0x1]
    %55 = vrot.lane.b32.xlu0 %v54, 56
    %v56 = vpop.permute.xlu0 %55
    %vm57 = vcmask 523712
    %58 = vst.msk [vmem:[#allocation0] sm:$0x1] %vm57, %v56
    %s59 = scalar_lea.vmem %s0, 6
    %v60 = vld [vmem:[%s59] sm:$0x1]
    %61 = vrot.lane.b32.xlu0 %v60, 48
    %v62 = vpop.permute.xlu0 %61
    %vm63 = vcmask 458112
    %64 = vst.msk [vmem:[#allocation0] sm:$0x1] %vm63, %v62
    %s65 = scalar_lea.vmem %s0, 5
    %v66 = vld [vmem:[%s65] sm:$0x1]
    %67 = vrot.lane.b32.xlu0 %v66, 40
    %v68 = vpop.permute.xlu0 %67
    %vm69 = vcmask 392512
    %70 = vst.msk [vmem:[#allocation0] sm:$0x1] %vm69, %v68
    %s71 = scalar_lea.vmem %s0, 4
    %v72 = vld [vmem:[%s71] sm:$0x1]
    %73 = vrot.lane.b32.xlu0 %v72, 32
    %v74 = vpop.permute.xlu0 %73
    %vm75 = vcmask 326912
    %76 = vst.msk [vmem:[#allocation0] sm:$0x1] %vm75, %v74
    %s77 = scalar_lea.vmem %s0, 3
    %v78 = vld [vmem:[%s77] sm:$0x1]
    %79 = vrot.lane.b32.xlu0 %v78, 24
    %v80 = vpop.permute.xlu0 %79
    %vm81 = vcmask 261312
    %82 = vst.msk [vmem:[#allocation0] sm:$0x1] %vm81, %v80
    %s83 = scalar_lea.vmem %s0, 2
    %v84 = vld [vmem:[%s83] sm:$0x1]
    %85 = vrot.lane.b32.xlu0 %v84, 16
    %v86 = vpop.permute.xlu0 %85
    %vm87 = vcmask 195712
    %88 = vst.msk [vmem:[#allocation0] sm:$0x1] %vm87, %v86
    %s89 = scalar_lea.vmem %s0, 1
    %v90 = vld [vmem:[%s89] sm:$0x1]
    %91 = vrot.lane.b32.xlu0 %v90, 8
    %v92 = vpop.permute.xlu0 %91
    %vm93 = vcmask 130112
    %94 = vst.msk [vmem:[#allocation0] sm:$0x1] %vm93, %v92
    %s96 = sshllo.u32 0, 1
    %v98 = vld [vmem:[#allocation0] sm:%s96]
    %s99 = sshllo.u32 0, 1
    %100 = vst [vmem:[%s1] sm:%s99] %v98

// kernel: iresidual_forward.3
$region0: #{iresidual_forward.3}
  #allocation0 [shape = 'u32[]', space=smem, size = 0x4, offset = 0x4, fixed_abs, tag = 'smem constant byte address 0x4 - core index']
  #allocation1 [shape = 'u32[144,128]{1,0:T(1,128)}', space=vmem, size = 0x12000, scoped, tag = 'internal scratch']
  #allocation2 [shape = 'f32[4,18,128]{2,1,0:T(8,128)}', space=vmem, size = 0xc000, scoped, tag = 'scratch operand']
  %s0 = inlined_call_operand.vmem [shape: f32[8,16,128], index: 0, kind: input, shape index: {}]
  %s1 = inlined_call_operand.vmem [shape: f32[3,128,128], index: 1, kind: input, shape index: {}]
  %s2 = inlined_call_operand.vmem [shape: f32[8,16,128], index: 2, kind: output, shape index: {0}]
  %s3 = inlined_call_operand.vmem [shape: f32[2,2,128], index: 3, kind: output, shape index: {1}]
  %4 = xla_tuple %s2, %s3
  %s5 = sld [smem:[#allocation0]]
  $region49: #{iresidual_forward.3} parent=0
    _
  %s7 = ssub.s32 1, %s5
  %s8 = scalar_select 0, %s7, %s5
  loop: start=0, step=1, limit=4
  $region2: #{iresidual_forward.3} parent=0 // loop_pre_header
    _
  $region3: #{iresidual_forward.3} parent=0 // loop_header
    %s10 = sphi 0, %s14
    %p11 = scmp.ge.s32.totalorder %s10, 4
    %s20 = sphi 0, %s22
    %s23 = sphi 0, %s20
    %s24 = sphi 0, %s23
    %s40 = sphi 0, %s24
    %s44 = sphi 0, %s44
    %s46 = sphi 0, %s44
    %s47 = sphi 0, %s46
    %s61 = sphi 0, %s47
    %s67 = sphi 0, %s69
    %s70 = sphi 0, %s67
    %s71 = sphi 0, %s70
    %s87 = sphi 0, %s71
    %s93 = sphi 0, %s95
    %s96 = sphi 0, %s93
    %s97 = sphi 0, %s96
    %s113 = sphi 0, %s97
  $region4: #{iresidual_forward.3} parent=0 // loop_header_branch
    %13 = sbr.rel (%p11) target = $region8
  $region5: #{iresidual_forward.3} parent=0 // loop_body
    %s15 = ssub.s32 %s10, 1
    %s16 = ssub.s32 %s10, 2
    %s17 = sadd.s32 %s10, 1
    %s18 = ssub.s32 %s10, %s17
    %p19 = scmp.eq.s32.totalorder %s18, 0
    %s21 = sadd.s32 %s20, 1
    %s22 = scalar_select %p19, %s20, %s21
    %p25 = pneg %p19
    %p26 = scmp.eq.s32.totalorder %s10, 1
    %p27 = por %p25, %p26
    %p28 = scmp.ne.s32.totalorder %s20, %s23
    %p29 = scmp.eq.s32.totalorder %s10, 0
    %p30 = por %p28, %p29
    %p31 = scmp.ne.s32.totalorder %s20, %s23
    %p32 = scmp.eq.s32.totalorder %s15, 1
    %p33 = por %p31, %p32
    %p34 = scmp.ne.s32.totalorder %s23, %s24
    %p35 = scmp.eq.s32.totalorder %s15, 0
    %p36 = por %p34, %p35
    %p37 = scmp.ne.s32.totalorder %s23, %s24
    %p38 = scmp.eq.s32.totalorder %s16, 1
    %p39 = por %p37, %p38
    %p41 = scmp.ne.s32.totalorder %s24, %s40
    %p42 = scmp.eq.s32.totalorder %s16, 0
    %p43 = por %p41, %p42
    %s45 = sadd.s32 %s44, 1
    %p48 = scmp.eq.s32.totalorder %s10, 1
    %p49 = scmp.ne.s32.totalorder %s44, %s46
    %p50 = scmp.eq.s32.totalorder %s10, 0
    %p51 = por %p49, %p50
    %p52 = scmp.ne.s32.totalorder %s44, %s46
    %p53 = scmp.eq.s32.totalorder %s15, 1
    %p54 = por %p52, %p53
    %p55 = scmp.ne.s32.totalorder %s46, %s47
    %p56 = scmp.eq.s32.totalorder %s15, 0
    %p57 = por %p55, %p56
    %p58 = scmp.ne.s32.totalorder %s46, %s47
    %p59 = scmp.eq.s32.totalorder %s16, 1
    %p60 = por %p58, %p59
    %p62 = scmp.ne.s32.totalorder %s47, %s61
    %p63 = scmp.eq.s32.totalorder %s16, 0
    %p64 = por %p62, %p63
    %s65 = ssub.s32 %s10, %s17
    %p66 = scmp.eq.s32.totalorder %s65, 0
    %s68 = sadd.s32 %s67, 1
    %s69 = scalar_select %p66, %s67, %s68
    %p72 = pneg %p66
    %p73 = scmp.eq.s32.totalorder %s10, 1
    %p74 = por %p72, %p73
    %p75 = scmp.ne.s32.totalorder %s67, %s70
    %p76 = scmp.eq.s32.totalorder %s10, 0
    %p77 = por %p75, %p76
    %p78 = scmp.ne.s32.totalorder %s67, %s70
    %p79 = scmp.eq.s32.totalorder %s15, 1
    %p80 = por %p78, %p79
    %p81 = scmp.ne.s32.totalorder %s70, %s71
    %p82 = scmp.eq.s32.totalorder %s15, 0
    %p83 = por %p81, %p82
    %p84 = scmp.ne.s32.totalorder %s70, %s71
    %p85 = scmp.eq.s32.totalorder %s16, 1
    %p86 = por %p84, %p85
    %p88 = scmp.ne.s32.totalorder %s71, %s87
    %p89 = scmp.eq.s32.totalorder %s16, 0
    %p90 = por %p88, %p89
    %s91 = ssub.s32 %s10, %s17
    %p92 = scmp.eq.s32.totalorder %s91, 0
    %s94 = sadd.s32 %s93, 1
    %s95 = scalar_select %p92, %s93, %s94
    %p98 = pneg %p92
    %p99 = scmp.eq.s32.totalorder %s10, 1
    %p100 = por %p98, %p99
    %p101 = scmp.ne.s32.totalorder %s93, %s96
    %p102 = scmp.eq.s32.totalorder %s10, 0
    %p103 = por %p101, %p102
    %p104 = scmp.ne.s32.totalorder %s93, %s96
    %p105 = scmp.eq.s32.totalorder %s15, 1
    %p106 = por %p104, %p105
    %p107 = scmp.ne.s32.totalorder %s96, %s97
    %p108 = scmp.eq.s32.totalorder %s15, 0
    %p109 = por %p107, %p108
    %p110 = scmp.ne.s32.totalorder %s96, %s97
    %p111 = scmp.eq.s32.totalorder %s16, 1
    %p112 = por %p110, %p111
    %p114 = scmp.ne.s32.totalorder %s97, %s113
    %p115 = scmp.eq.s32.totalorder %s16, 0
    %p116 = por %p114, %p115
    %p117 = scmp.le.s32.totalorder 1, %s10
    %p118 = scmp.lt.s32.totalorder %s10, 3
    %p119 = pnand %p117, %p118
    %p120 = pneg %p119
    // Predicated region
    $region9: #{iresidual_forward.3} parent=5 // pred_check
      _
    $region10: #{iresidual_forward.3} parent=5 // pred_check_branch
      %122 = sbr.rel (%p119) target = $region12
    $region11: #{iresidual_forward.3} parent=5 // pred_region
      %s123 = ssub.s32 %s10, 1
      // Predicated region
      $region13: #{iresidual_forward.3} parent=11 // pred_check
        %p124 = pneg %p57
      $region14: #{iresidual_forward.3} parent=11 // pred_check_branch
        %126 = sbr.rel (%p124) target = $region16
      $region15: #{iresidual_forward.3} parent=11 // pred_region
        _
      $region16: #{iresidual_forward.3} parent=11 // pred_fallthru
        _
    $region12: #{iresidual_forward.3} parent=5 // pred_fallthru
      _
    %p127 = scmp.lt.s32.totalorder %s10, 2
    // Predicated region
    $region17: #{iresidual_forward.3} parent=5 // pred_check
      %p128 = pneg %p127
    $region18: #{iresidual_forward.3} parent=5 // pred_check_branch
      %130 = sbr.rel (%p128) target = $region20
    $region19: #{iresidual_forward.3} parent=5 // pred_region
      // Predicated region
      $region21: #{iresidual_forward.3} parent=19 // pred_check
        %p131 = pneg %p30
      $region22: #{iresidual_forward.3} parent=19 // pred_check_branch
        %133 = sbr.rel (%p131) target = $region24
      $region23: #{iresidual_forward.3} parent=19 // pred_region
        %s134 = smul.u32 4, %s10
        %p135 = scmp.lt.s32.totalorder %s134, 7
        %s136 = scalar_select %p135, %s134, 7
        %s137 = smul.addr %s136, 2
        %s138 = smul.addr %s137, 8
        %s139 = scalar_lea.vmem %s0, %s138
        %s140 = smul.u32 4, %s10
      $region24: #{iresidual_forward.3} parent=19 // pred_fallthru
        _
    $region20: #{iresidual_forward.3} parent=5 // pred_fallthru
      _
    %p141 = scmp.le.s32.totalorder 1, %s10
    %p142 = scmp.lt.s32.totalorder %s10, 3
    %p143 = pnand %p141, %p142
    %p144 = pneg %p143
    // Predicated region
    $region25: #{iresidual_forward.3} parent=5 // pred_check
      _
    $region26: #{iresidual_forward.3} parent=5 // pred_check_branch
      %146 = sbr.rel (%p143) target = $region28
    $region27: #{iresidual_forward.3} parent=5 // pred_region
      %s147 = ssub.s32 %s10, 1
      %s148 = smul.u32 4, %s15
      %p149 = scmp.lt.s32.totalorder %s148, 7
      %s150 = scalar_select %p149, %s148, 7
      %s151 = smul.addr %s150, 2
      %s152 = smul.addr %s151, 8
      %s153 = scalar_lea.vmem %s0, %s152
      %p154 = pneg %p36
      %p155 = pneg %p33
      %p156 = pneg %p57
      %p157 = pneg %p54
      %p158 = pneg %p83
      %p159 = pneg %p80
      %s160 = smul.u32 4, %s15
      %p161 = scmp.lt.s32.totalorder %s160, 7
      %s162 = scalar_select %p161, %s160, 7
      %s163 = smul.addr %s162, 2
      %s164 = smul.addr %s163, 8
      %s165 = scalar_lea.vmem %s2, %s164
      %p166 = pneg %p109
      %p167 = pneg %p106
      %p168 = scmp.lt.s32.totalorder %s15, 1
      %s169 = scalar_select %p168, %s15, 1
      %s170 = smul.addr %s169, 2
      %s171 = scalar_lea.vmem %s3, %s170
      %s172 = smul.u32 4, %s15
      %p173 = scmp.lt.s32.totalorder %s172, 7
      %s174 = scalar_select %p173, %s172, 7
      %s175 = smul.addr %s174, 2
      %s176 = smul.addr %s175, 8
      %s177 = scalar_lea.vmem %s0, %s176
      %s178 = smul.u32 4, %s15
      %s179 = smul.u32 4, %s15
      %p180 = scmp.lt.s32.totalorder %s179, 7
      %s181 = scalar_select %p180, %s179, 7
      %s182 = smul.addr %s181, 2
      %s183 = smul.addr %s182, 8
      %s184 = scalar_lea.vmem %s2, %s183
      %s185 = smul.u32 4, %s15
      %p186 = scmp.lt.s32.totalorder %s15, 1
      %s187 = scalar_select %p186, %s15, 1
      %s188 = smul.addr %s187, 2
      %s189 = scalar_lea.vmem %s3, %s188
      %v190 = vld [vmem:[%s177] sm:$0xff]
      %v191 = vld [vmem:[%s177 + $0x8] sm:$0xff]
      %v192 = vld [vmem:[%s177 + $0x10] sm:$0xff]
      %v193 = vld [vmem:[%s177 + $0x18] sm:$0xff]
      %v194 = vld [vmem:[%s177 + $0x20] sm:$0xff]
      %v195 = vld [vmem:[%s177 + $0x28] sm:$0xff]
      %v196 = vld [vmem:[%s177 + $0x30] sm:$0xff]
      %v197 = vld [vmem:[%s177 + $0x38] sm:$0xff]
      %198 = vst [vmem:[#allocation2] sm:$0x1] 0.0
      %199 = vst [vmem:[#allocation2 + $0x18] sm:$0x1] 0.0
      %200 = vst [vmem:[#allocation2 + $0x30] sm:$0x1] 0.0
      %201 = vst [vmem:[#allocation2 + $0x48] sm:$0x1] 0.0
      %202 = vst [vmem:[#allocation2 + $0x11] sm:$0x1] 0.0
      %203 = vst [vmem:[#allocation2 + $0x29] sm:$0x1] 0.0
      %204 = vst [vmem:[#allocation2 + $0x41] sm:$0x1] 0.0
      %205 = vst [vmem:[#allocation2 + $0x59] sm:$0x1] 0.0
      %206 = vst [vmem:[#allocation2 + $0x1] sm:$0xff] %v190
      %207 = vst [vmem:[#allocation2 + $0x9] sm:$0xff] %v191
      %208 = vst [vmem:[#allocation2 + $0x19] sm:$0xff] %v192
      %209 = vst [vmem:[#allocation2 + $0x21] sm:$0xff] %v193
      %210 = vst [vmem:[#allocation2 + $0x31] sm:$0xff] %v194
      %211 = vst [vmem:[#allocation2 + $0x39] sm:$0xff] %v195
      %212 = vst [vmem:[#allocation2 + $0x49] sm:$0xff] %v196
      %213 = vst [vmem:[#allocation2 + $0x51] sm:$0xff] %v197
      %v214 = vld [vmem:[#allocation2] sm:$0xff]
      %v215 = vld [vmem:[#allocation2 + $0x8] sm:$0xff]
      %v216 = vld [vmem:[#allocation2 + $0x18] sm:$0xff]
      %v217 = vld [vmem:[#allocation2 + $0x20] sm:$0xff]
      %v218 = vld [vmem:[#allocation2 + $0x30] sm:$0xff]
      %v219 = vld [vmem:[#allocation2 + $0x38] sm:$0xff]
      %v220 = vld [vmem:[#allocation2 + $0x48] sm:$0xff]
      %v221 = vld [vmem:[#allocation2 + $0x50] sm:$0xff]
      %v222 = vld [vmem:[%s1] sm:$0xff]
      %v223 = vld [vmem:[%s1 + $0x8] sm:$0xff]
      %v224 = vld [vmem:[%s1 + $0x10] sm:$0xff]
      %v225 = vld [vmem:[%s1 + $0x18] sm:$0xff]
      %v226 = vld [vmem:[%s1 + $0x20] sm:$0xff]
      %v227 = vld [vmem:[%s1 + $0x28] sm:$0xff]
      %v228 = vld [vmem:[%s1 + $0x30] sm:$0xff]
      %v229 = vld [vmem:[%s1 + $0x38] sm:$0xff]
      %v230 = vld [vmem:[%s1 + $0x40] sm:$0xff]
      %v231 = vld [vmem:[%s1 + $0x48] sm:$0xff]
      %v232 = vld [vmem:[%s1 + $0x50] sm:$0xff]
      %v233 = vld [vmem:[%s1 + $0x58] sm:$0xff]
      %v234 = vld [vmem:[%s1 + $0x60] sm:$0xff]
      %v235 = vld [vmem:[%s1 + $0x68] sm:$0xff]
      %v236 = vld [vmem:[%s1 + $0x70] sm:$0xff]
      %v237 = vld [vmem:[%s1 + $0x78] sm:$0xff]
      %v238 = vld [vmem:[#allocation2 + $0x1] sm:$0xff]
      %v239 = vld [vmem:[#allocation2 + $0x9] sm:$0xff]
      %v240 = vld [vmem:[#allocation2 + $0x19] sm:$0xff]
      %v241 = vld [vmem:[#allocation2 + $0x21] sm:$0xff]
      %v242 = vld [vmem:[#allocation2 + $0x31] sm:$0xff]
      %v243 = vld [vmem:[#allocation2 + $0x39] sm:$0xff]
      %v244 = vld [vmem:[#allocation2 + $0x49] sm:$0xff]
      %v245 = vld [vmem:[#allocation2 + $0x51] sm:$0xff]
      %s246 = scalar_lea.vmem %s1, 128
      %v247 = vld [vmem:[%s246] sm:$0xff]
      %v248 = vld [vmem:[%s246 + $0x8] sm:$0xff]
      %v249 = vld [vmem:[%s246 + $0x10] sm:$0xff]
      %v250 = vld [vmem:[%s246 + $0x18] sm:$0xff]
      %v251 = vld [vmem:[%s246 + $0x20] sm:$0xff]
      %v252 = vld [vmem:[%s246 + $0x28] sm:$0xff]
      %v253 = vld [vmem:[%s246 + $0x30] sm:$0xff]
      %v254 = vld [vmem:[%s246 + $0x38] sm:$0xff]
      %v255 = vld [vmem:[%s246 + $0x40] sm:$0xff]
      %v256 = vld [vmem:[%s246 + $0x48] sm:$0xff]
      %v257 = vld [vmem:[%s246 + $0x50] sm:$0xff]
      %v258 = vld [vmem:[%s246 + $0x58] sm:$0xff]
      %v259 = vld [vmem:[%s246 + $0x60] sm:$0xff]
      %v260 = vld [vmem:[%s246 + $0x68] sm:$0xff]
      %v261 = vld [vmem:[%s246 + $0x70] sm:$0xff]
      %v262 = vld [vmem:[%s246 + $0x78] sm:$0xff]
      %263 = vmatprep.subr.mxu0 0.0
      %264 = vmatpush1.msra.mxu0 %v247
      %265 = vmatprep.subr.mxu0 0.0
      %266 = vmatpush1.msra.mxu0 %v248
      %267 = vmatprep.subr.mxu0 0.0
      %268 = vmatpush1.msra.mxu0 %v249
      %269 = vmatprep.subr.mxu0 0.0
      %270 = vmatpush1.msra.mxu0 %v250
      %271 = vmatprep.subr.mxu0 0.0
      %272 = vmatpush1.msra.mxu0 %v251
      %273 = vmatprep.subr.mxu0 0.0
      %274 = vmatpush1.msra.mxu0 %v252
      %275 = vmatprep.subr.mxu0 0.0
      %276 = vmatpush1.msra.mxu0 %v253
      %277 = vmatprep.subr.mxu0 0.0
      %278 = vmatpush1.msra.mxu0 %v254
      %279 = vmatprep.subr.mxu0 0.0
      %280 = vmatpush1.msra.mxu0 %v255
      %281 = vmatprep.subr.mxu0 0.0
      %282 = vmatpush1.msra.mxu0 %v256
      %283 = vmatprep.subr.mxu0 0.0
      %284 = vmatpush1.msra.mxu0 %v257
      %285 = vmatprep.subr.mxu0 0.0
      %286 = vmatpush1.msra.mxu0 %v258
      %287 = vmatprep.subr.mxu0 0.0
      %288 = vmatpush1.msra.mxu0 %v259
      %289 = vmatprep.subr.mxu0 0.0
      %290 = vmatpush1.msra.mxu0 %v260
      %291 = vmatprep.subr.mxu0 0.0
      %292 = vmatpush1.msra.mxu0 %v261
      %293 = vmatprep.subr.mxu0 0.0
      %294 = vmatpush1.msra.mxu0 %v262
      %295 = vmatprep.subr.mxu0 0.0
      %296 = vmatpush1.msra.mxu0 0.0
      %297 = vmatprep.subr.mxu0 0.0
      %298 = vmatpush1.msra.mxu0 0.0
      %299 = vmatprep.subr.mxu0 0.0
      %300 = vmatpush1.msra.mxu0 0.0
      %301 = vmatprep.subr.mxu0 0.0
      %302 = vmatpush1.msra.mxu0 0.0
      %303 = vmatprep.subr.mxu0 0.0
      %304 = vmatpush1.msra.mxu0 0.0
      %305 = vmatprep.subr.mxu0 0.0
      %306 = vmatpush1.msra.mxu0 0.0
      %307 = vmatprep.subr.mxu0 0.0
      %308 = vmatpush1.msra.mxu0 0.0
      %309 = vmatprep.subr.mxu0 0.0
      %310 = vmatpush1.msra.mxu0 0.0
      %311 = vmatprep.subr.mxu0 0.0
      %312 = vmatpush1.msra.mxu0 0.0
      %313 = vmatprep.subr.mxu0 0.0
      %314 = vmatpush1.msra.mxu0 0.0
      %315 = vmatprep.subr.mxu0 0.0
      %316 = vmatpush1.msra.mxu0 0.0
      %317 = vmatprep.subr.mxu0 0.0
      %318 = vmatpush1.msra.mxu0 0.0
      %319 = vmatprep.subr.mxu0 0.0
      %320 = vmatpush1.msra.mxu0 0.0
      %321 = vmatprep.subr.mxu0 0.0
      %322 = vmatpush1.msra.mxu0 0.0
      %323 = vmatprep.subr.mxu0 0.0
      %324 = vmatpush1.msra.mxu0 0.0
      %325 = vmatprep.subr.mxu0 0.0
      %326 = vmatpush1.msra.mxu0 0.0
      %327 = vmatprep.mubr.f32.mxu0 0.0
      %328 = vmatmul.mubr.f32.gmra.mrb[0].mxu0 %v238
      %v329 = vpop.f32.mrb[0].mxu0
      %v330 = vadd.f32 0.0, %v329
      %v331 = vpop.f32.mrb[0].mxu0
      %332 = vmatprep.mubr.f32.mxu0 0.0
      %333 = vmatmul.mubr.f32.gmra.mrb[0].mxu0 %v239
      %v334 = vpop.f32.mrb[0].mxu0
      %v335 = vadd.f32 0.0, %v334
      %v336 = vpop.f32.mrb[0].mxu0
      %337 = vmatprep.mubr.f32.mxu0 0.0
      %338 = vmatmul.mubr.f32.gmra.mrb[0].mxu0 %v240
      %v339 = vpop.f32.mrb[0].mxu0
      %v340 = vadd.f32 0.0, %v339
      %v341 = vpop.f32.mrb[0].mxu0
      %342 = vmatprep.mubr.f32.mxu0 0.0
      %343 = vmatmul.mubr.f32.gmra.mrb[0].mxu0 %v241
      %v344 = vpop.f32.mrb[0].mxu0
      %v345 = vadd.f32 0.0, %v344
      %v346 = vpop.f32.mrb[0].mxu0
      %347 = vmatprep.mubr.f32.mxu0 0.0
      %348 = vmatmul.mubr.f32.gmra.mrb[0].mxu0 %v242
      %v349 = vpop.f32.mrb[0].mxu0
      %v350 = vadd.f32 0.0, %v349
      %v351 = vpop.f32.mrb[0].mxu0
      %352 = vmatprep.mubr.f32.mxu0 0.0
      %353 = vmatmul.mubr.f32.gmra.mrb[0].mxu0 %v243
      %v354 = vpop.f32.mrb[0].mxu0
      %v355 = vadd.f32 0.0, %v354
      %v356 = vpop.f32.mrb[0].mxu0
      %357 = vmatprep.mubr.f32.mxu0 0.0
      %358 = vmatmul.mubr.f32.gmra.mrb[0].mxu0 %v244
      %v359 = vpop.f32.mrb[0].mxu0
      %v360 = vadd.f32 0.0, %v359
      %v361 = vpop.f32.mrb[0].mxu0
      %362 = vmatprep.mubr.f32.mxu0 0.0
      %363 = vmatmul.mubr.f32.gmra.mrb[0].mxu0 %v245
      %v364 = vpop.f32.mrb[0].mxu0
      %v365 = vadd.f32 0.0, %v364
      %v366 = vpop.f32.mrb[0].mxu0
      %367 = vdwg.mxu0
      %368 = vmatprep.subr.mxu0 0.0
      %369 = vmatpush1.msra.mxu0 %v222
      %370 = vmatprep.subr.mxu0 0.0
      %371 = vmatpush1.msra.mxu0 %v223
      %372 = vmatprep.subr.mxu0 0.0
      %373 = vmatpush1.msra.mxu0 %v224
      %374 = vmatprep.subr.mxu0 0.0
      %375 = vmatpush1.msra.mxu0 %v225
      %376 = vmatprep.subr.mxu0 0.0
      %377 = vmatpush1.msra.mxu0 %v226
      %378 = vmatprep.subr.mxu0 0.0
      %379 = vmatpush1.msra.mxu0 %v227
      %380 = vmatprep.subr.mxu0 0.0
      %381 = vmatpush1.msra.mxu0 %v228
      %382 = vmatprep.subr.mxu0 0.0
      %383 = vmatpush1.msra.mxu0 %v229
      %384 = vmatprep.subr.mxu0 0.0
      %385 = vmatpush1.msra.mxu0 %v230
      %386 = vmatprep.subr.mxu0 0.0
      %387 = vmatpush1.msra.mxu0 %v231
      %388 = vmatprep.subr.mxu0 0.0
      %389 = vmatpush1.msra.mxu0 %v232
      %390 = vmatprep.subr.mxu0 0.0
      %391 = vmatpush1.msra.mxu0 %v233
      %392 = vmatprep.subr.mxu0 0.0
      %393 = vmatpush1.msra.mxu0 %v234
      %394 = vmatprep.subr.mxu0 0.0
      %395 = vmatpush1.msra.mxu0 %v235
      %396 = vmatprep.subr.mxu0 0.0
      %397 = vmatpush1.msra.mxu0 %v236
      %398 = vmatprep.subr.mxu0 0.0
      %399 = vmatpush1.msra.mxu0 %v237
      %400 = vmatprep.subr.mxu0 0.0
      %401 = vmatpush1.msra.mxu0 0.0
      %402 = vmatprep.subr.mxu0 0.0
      %403 = vmatpush1.msra.mxu0 0.0
      %404 = vmatprep.subr.mxu0 0.0
      %405 = vmatpush1.msra.mxu0 0.0
      %406 = vmatprep.subr.mxu0 0.0
      %407 = vmatpush1.msra.mxu0 0.0
      %408 = vmatprep.subr.mxu0 0.0
      %409 = vmatpush1.msra.mxu0 0.0
      %410 = vmatprep.subr.mxu0 0.0
      %411 = vmatpush1.msra.mxu0 0.0
      %412 = vmatprep.subr.mxu0 0.0
      %413 = vmatpush1.msra.mxu0 0.0
      %414 = vmatprep.subr.mxu0 0.0
      %415 = vmatpush1.msra.mxu0 0.0
      %416 = vmatprep.subr.mxu0 0.0
      %417 = vmatpush1.msra.mxu0 0.0
      %418 = vmatprep.subr.mxu0 0.0
      %419 = vmatpush1.msra.mxu0 0.0
      %420 = vmatprep.subr.mxu0 0.0
      %421 = vmatpush1.msra.mxu0 0.0
      %422 = vmatprep.subr.mxu0 0.0
      %423 = vmatpush1.msra.mxu0 0.0
      %424 = vmatprep.subr.mxu0 0.0
      %425 = vmatpush1.msra.mxu0 0.0
      %426 = vmatprep.subr.mxu0 0.0
      %427 = vmatpush1.msra.mxu0 0.0
      %428 = vmatprep.subr.mxu0 0.0
      %429 = vmatpush1.msra.mxu0 0.0
      %430 = vmatprep.subr.mxu0 0.0
      %431 = vmatpush1.msra.mxu0 0.0
      %432 = vmatprep.mubr.f32.mxu0 0.0
      %433 = vmatmul.mubr.f32.gmra.mrb[0].mxu0 %v214
      %v434 = vpop.f32.mrb[0].mxu0
      %v435 = vadd.f32 %v330, %v434
      %v436 = vpop.f32.mrb[0].mxu0
      %437 = vmatprep.mubr.f32.mxu0 0.0
      %438 = vmatmul.mubr.f32.gmra.mrb[0].mxu0 %v215
      %v439 = vpop.f32.mrb[0].mxu0
      %v440 = vadd.f32 %v335, %v439
      %v441 = vpop.f32.mrb[0].mxu0
      %442 = vmatprep.mubr.f32.mxu0 0.0
      %443 = vmatmul.mubr.f32.gmra.mrb[0].mxu0 %v216
      %v444 = vpop.f32.mrb[0].mxu0
      %v445 = vadd.f32 %v340, %v444
      %v446 = vpop.f32.mrb[0].mxu0
      %447 = vmatprep.mubr.f32.mxu0 0.0
      %448 = vmatmul.mubr.f32.gmra.mrb[0].mxu0 %v217
      %v449 = vpop.f32.mrb[0].mxu0
      %v450 = vadd.f32 %v345, %v449
      %v451 = vpop.f32.mrb[0].mxu0
      %452 = vmatprep.mubr.f32.mxu0 0.0
      %453 = vmatmul.mubr.f32.gmra.mrb[0].mxu0 %v218
      %v454 = vpop.f32.mrb[0].mxu0
      %v455 = vadd.f32 %v350, %v454
      %v456 = vpop.f32.mrb[0].mxu0
      %457 = vmatprep.mubr.f32.mxu0 0.0
      %458 = vmatmul.mubr.f32.gmra.mrb[0].mxu0 %v219
      %v459 = vpop.f32.mrb[0].mxu0
      %v460 = vadd.f32 %v355, %v459
      %v461 = vpop.f32.mrb[0].mxu0
      %462 = vmatprep.mubr.f32.mxu0 0.0
      %463 = vmatmul.mubr.f32.gmra.mrb[0].mxu0 %v220
      %v464 = vpop.f32.mrb[0].mxu0
      %v465 = vadd.f32 %v360, %v464
      %v466 = vpop.f32.mrb[0].mxu0
      %467 = vmatprep.mubr.f32.mxu0 0.0
      %468 = vmatmul.mubr.f32.gmra.mrb[0].mxu0 %v221
      %v469 = vpop.f32.mrb[0].mxu0
      %v470 = vadd.f32 %v365, %v469
      %v471 = vpop.f32.mrb[0].mxu0
      %472 = vdwg.mxu0
      %v473 = vld [vmem:[#allocation2 + $0x2] sm:$0xff]
      %v474 = vld [vmem:[#allocation2 + $0xa] sm:$0xff]
      %v475 = vld [vmem:[#allocation2 + $0x1a] sm:$0xff]
      %v476 = vld [vmem:[#allocation2 + $0x22] sm:$0xff]
      %v477 = vld [vmem:[#allocation2 + $0x32] sm:$0xff]
      %v478 = vld [vmem:[#allocation2 + $0x3a] sm:$0xff]
      %v479 = vld [vmem:[#allocation2 + $0x4a] sm:$0xff]
      %v480 = vld [vmem:[#allocation2 + $0x52] sm:$0xff]
      %s481 = scalar_lea.vmem %s1, 256
      %v482 = vld [vmem:[%s481] sm:$0xff]
      %v483 = vld [vmem:[%s481 + $0x8] sm:$0xff]
      %v484 = vld [vmem:[%s481 + $0x10] sm:$0xff]
      %v485 = vld [vmem:[%s481 + $0x18] sm:$0xff]
      %v486 = vld [vmem:[%s481 + $0x20] sm:$0xff]
      %v487 = vld [vmem:[%s481 + $0x28] sm:$0xff]
      %v488 = vld [vmem:[%s481 + $0x30] sm:$0xff]
      %v489 = vld [vmem:[%s481 + $0x38] sm:$0xff]
      %v490 = vld [vmem:[%s481 + $0x40] sm:$0xff]
      %v491 = vld [vmem:[%s481 + $0x48] sm:$0xff]
      %v492 = vld [vmem:[%s481 + $0x50] sm:$0xff]
      %v493 = vld [vmem:[%s481 + $0x58] sm:$0xff]
      %v494 = vld [vmem:[%s481 + $0x60] sm:$0xff]
      %v495 = vld [vmem:[%s481 + $0x68] sm:$0xff]
      %v496 = vld [vmem:[%s481 + $0x70] sm:$0xff]
      %v497 = vld [vmem:[%s481 + $0x78] sm:$0xff]
      %498 = vmatprep.subr.mxu0 0.0
      %499 = vmatpush1.msra.mxu0 %v482
      %500 = vmatprep.subr.mxu0 0.0
      %501 = vmatpush1.msra.mxu0 %v483
      %502 = vmatprep.subr.mxu0 0.0
      %503 = vmatpush1.msra.mxu0 %v484
      %504 = vmatprep.subr.mxu0 0.0
      %505 = vmatpush1.msra.mxu0 %v485
      %506 = vmatprep.subr.mxu0 0.0
      %507 = vmatpush1.msra.mxu0 %v486
      %508 = vmatprep.subr.mxu0 0.0
      %509 = vmatpush1.msra.mxu0 %v487
      %510 = vmatprep.subr.mxu0 0.0
      %511 = vmatpush1.msra.mxu0 %v488
      %512 = vmatprep.subr.mxu0 0.0
      %513 = vmatpush1.msra.mxu0 %v489
      %514 = vmatprep.subr.mxu0 0.0
      %515 = vmatpush1.msra.mxu0 %v490
      %516 = vmatprep.subr.mxu0 0.0
      %517 = vmatpush1.msra.mxu0 %v491
      %518 = vmatprep.subr.mxu0 0.0
      %519 = vmatpush1.msra.mxu0 %v492
      %520 = vmatprep.subr.mxu0 0.0
      %521 = vmatpush1.msra.mxu0 %v493
      %522 = vmatprep.subr.mxu0 0.0
      %523 = vmatpush1.msra.mxu0 %v494
      %524 = vmatprep.subr.mxu0 0.0
      %525 = vmatpush1.msra.mxu0 %v495
      %526 = vmatprep.subr.mxu0 0.0
      %527 = vmatpush1.msra.mxu0 %v496
      %528 = vmatprep.subr.mxu0 0.0
      %529 = vmatpush1.msra.mxu0 %v497
      %530 = vmatprep.subr.mxu0 0.0
      %531 = vmatpush1.msra.mxu0 0.0
      %532 = vmatprep.subr.mxu0 0.0
      %533 = vmatpush1.msra.mxu0 0.0
      %534 = vmatprep.subr.mxu0 0.0
      %535 = vmatpush1.msra.mxu0 0.0
      %536 = vmatprep.subr.mxu0 0.0
      %537 = vmatpush1.msra.mxu0 0.0
      %538 = vmatprep.subr.mxu0 0.0
      %539 = vmatpush1.msra.mxu0 0.0
      %540 = vmatprep.subr.mxu0 0.0
      %541 = vmatpush1.msra.mxu0 0.0
      %542 = vmatprep.subr.mxu0 0.0
      %543 = vmatpush1.msra.mxu0 0.0
      %544 = vmatprep.subr.mxu0 0.0
      %545 = vmatpush1.msra.mxu0 0.0
      %546 = vmatprep.subr.mxu0 0.0
      %547 = vmatpush1.msra.mxu0 0.0
      %548 = vmatprep.subr.mxu0 0.0
      %549 = vmatpush1.msra.mxu0 0.0
      %550 = vmatprep.subr.mxu0 0.0
      %551 = vmatpush1.msra.mxu0 0.0
      %552 = vmatprep.subr.mxu0 0.0
      %553 = vmatpush1.msra.mxu0 0.0
      %554 = vmatprep.subr.mxu0 0.0
      %555 = vmatpush1.msra.mxu0 0.0
      %556 = vmatprep.subr.mxu0 0.0
      %557 = vmatpush1.msra.mxu0 0.0
      %558 = vmatprep.subr.mxu0 0.0
      %559 = vmatpush1.msra.mxu0 0.0
      %560 = vmatprep.subr.mxu0 0.0
      %561 = vmatpush1.msra.mxu0 0.0
      %562 = vmatprep.mubr.f32.mxu0 0.0
      %563 = vmatmul.mubr.f32.gmra.mrb[0].mxu0 %v473
      %v564 = vpop.f32.mrb[0].mxu0
      %v565 = vadd.f32 0.0, %v564
      %v566 = vpop.f32.mrb[0].mxu0
      %567 = vmatprep.mubr.f32.mxu0 0.0
      %568 = vmatmul.mubr.f32.gmra.mrb[0].mxu0 %v474
      %v569 = vpop.f32.mrb[0].mxu0
      %v570 = vadd.f32 0.0, %v569
      %v571 = vpop.f32.mrb[0].mxu0
      %572 = vmatprep.mubr.f32.mxu0 0.0
      %573 = vmatmul.mubr.f32.gmra.mrb[0].mxu0 %v475
      %v574 = vpop.f32.mrb[0].mxu0
      %v575 = vadd.f32 0.0, %v574
      %v576 = vpop.f32.mrb[0].mxu0
      %577 = vmatprep.mubr.f32.mxu0 0.0
      %578 = vmatmul.mubr.f32.gmra.mrb[0].mxu0 %v476
      %v579 = vpop.f32.mrb[0].mxu0
      %v580 = vadd.f32 0.0, %v579
      %v581 = vpop.f32.mrb[0].mxu0
      %582 = vmatprep.mubr.f32.mxu0 0.0
      %583 = vmatmul.mubr.f32.gmra.mrb[0].mxu0 %v477
      %v584 = vpop.f32.mrb[0].mxu0
      %v585 = vadd.f32 0.0, %v584
      %v586 = vpop.f32.mrb[0].mxu0
      %587 = vmatprep.mubr.f32.mxu0 0.0
      %588 = vmatmul.mubr.f32.gmra.mrb[0].mxu0 %v478
      %v589 = vpop.f32.mrb[0].mxu0
      %v590 = vadd.f32 0.0, %v589
      %v591 = vpop.f32.mrb[0].mxu0
      %592 = vmatprep.mubr.f32.mxu0 0.0
      %593 = vmatmul.mubr.f32.gmra.mrb[0].mxu0 %v479
      %v594 = vpop.f32.mrb[0].mxu0
      %v595 = vadd.f32 0.0, %v594
      %v596 = vpop.f32.mrb[0].mxu0
      %597 = vmatprep.mubr.f32.mxu0 0.0
      %598 = vmatmul.mubr.f32.gmra.mrb[0].mxu0 %v480
      %v599 = vpop.f32.mrb[0].mxu0
      %v600 = vadd.f32 0.0, %v599
      %v601 = vpop.f32.mrb[0].mxu0
      %602 = vdwg.mxu0
      %v603 = vadd.f32 %v435, %v565
      %v604 = vadd.f32 %v440, %v570
      %v605 = vadd.f32 %v445, %v575
      %v606 = vadd.f32 %v450, %v580
      %v607 = vadd.f32 %v455, %v585
      %v608 = vadd.f32 %v460, %v590
      %v609 = vadd.f32 %v465, %v595
      %v610 = vadd.f32 %v470, %v600
      %v611 = vadd.f32 %v603, %v604
      %v612 = vadd.f32 %v611, %v605
      %v613 = vadd.f32 %v612, %v606
      %v614 = vadd.f32 %v613, %v607
      %v615 = vadd.f32 %v614, %v608
      %v616 = vadd.f32 %v615, %v609
      %v617 = vadd.f32 %v616, %v610
      %v618 = vrot.slane %v617, 4
      %v619 = vadd.f32 %v617, %v618
      %v620 = vrot.slane %v619, 2
      %v621 = vadd.f32 %v619, %v620
      %v622 = vrot.slane %v621, 1
      %v623 = vadd.f32 %v621, %v622
      %v624 = vmul.f32 %v603, %v603
      %v625 = vmul.f32 %v604, %v604
      %v626 = vmul.f32 %v605, %v605
      %v627 = vmul.f32 %v606, %v606
      %v628 = vmul.f32 %v607, %v607
      %v629 = vmul.f32 %v608, %v608
      %v630 = vmul.f32 %v609, %v609
      %v631 = vmul.f32 %v610, %v610
      %v632 = vadd.f32 %v624, %v625
      %v633 = vadd.f32 %v632, %v626
      %v634 = vadd.f32 %v633, %v627
      %v635 = vadd.f32 %v634, %v628
      %v636 = vadd.f32 %v635, %v629
      %v637 = vadd.f32 %v636, %v630
      %v638 = vadd.f32 %v637, %v631
      %v639 = vrot.slane %v638, 4
      %v640 = vadd.f32 %v638, %v639
      %v641 = vrot.slane %v640, 2
      %v642 = vadd.f32 %v640, %v641
      %v643 = vrot.slane %v642, 1
      %v644 = vadd.f32 %v642, %v643
      %645 = vst [vmem:[%s189] sm:$0x1] %v623
      %646 = vst [vmem:[%s189 + $0x1] sm:$0x1] %v644
      %647 = vst [vmem:[%s184] sm:$0xff] %v603
      %648 = vst [vmem:[%s184 + $0x8] sm:$0xff] %v604
      %649 = vst [vmem:[%s184 + $0x10] sm:$0xff] %v605
      %650 = vst [vmem:[%s184 + $0x18] sm:$0xff] %v606
      %651 = vst [vmem:[%s184 + $0x20] sm:$0xff] %v607
      %652 = vst [vmem:[%s184 + $0x28] sm:$0xff] %v608
      %653 = vst [vmem:[%s184 + $0x30] sm:$0xff] %v609
      %654 = vst [vmem:[%s184 + $0x38] sm:$0xff] %v610
      %s655 = smul.u32 4, %s15
      %p656 = scmp.lt.s32.totalorder %s655, 7
      %s657 = scalar_select %p656, %s655, 7
      %s658 = smul.addr %s657, 2
      %s659 = smul.addr %s658, 8
      %s660 = scalar_lea.vmem %s2, %s659
      %p661 = scmp.lt.s32.totalorder %s15, 1
      %s662 = scalar_select %p661, %s15, 1
      %s663 = smul.addr %s662, 2
      %s664 = scalar_lea.vmem %s3, %s663
      // Predicated region
      $region29: #{iresidual_forward.3} parent=27 // pred_check
        %p665 = pneg %p80
      $region30: #{iresidual_forward.3} parent=27 // pred_check_branch
        %667 = sbr.rel (%p665) target = $region32
      $region31: #{iresidual_forward.3} parent=27 // pred_region
        %s668 = smul.u32 4, %s15
      $region32: #{iresidual_forward.3} parent=27 // pred_fallthru
        _
      // Predicated region
      $region33: #{iresidual_forward.3} parent=27 // pred_check
        %p669 = pneg %p106
      $region34: #{iresidual_forward.3} parent=27 // pred_check_branch
        %671 = sbr.rel (%p669) target = $region36
      $region35: #{iresidual_forward.3} parent=27 // pred_region
        _
      $region36: #{iresidual_forward.3} parent=27 // pred_fallthru
        _
    $region28: #{iresidual_forward.3} parent=5 // pred_fallthru
      _
    %p672 = scmp.le.s32.totalorder 2, %s10
    // Predicated region
    $region37: #{iresidual_forward.3} parent=5 // pred_check
      %p673 = pneg %p672
    $region38: #{iresidual_forward.3} parent=5 // pred_check_branch
      %675 = sbr.rel (%p673) target = $region40
    $region39: #{iresidual_forward.3} parent=5 // pred_region
      %s676 = ssub.s32 %s10, 2
      // Predicated region
      $region41: #{iresidual_forward.3} parent=39 // pred_check
        %p677 = pneg %p86
      $region42: #{iresidual_forward.3} parent=39 // pred_check_branch
        %679 = sbr.rel (%p677) target = $region44
      $region43: #{iresidual_forward.3} parent=39 // pred_region
        %s680 = smul.u32 4, %s16
        %p681 = scmp.lt.s32.totalorder %s680, 7
        %s682 = scalar_select %p681, %s680, 7
        %s683 = smul.addr %s682, 2
        %s684 = smul.addr %s683, 8
        %s685 = scalar_lea.vmem %s2, %s684
      $region44: #{iresidual_forward.3} parent=39 // pred_fallthru
        _
      // Predicated region
      $region45: #{iresidual_forward.3} parent=39 // pred_check
        %p686 = pneg %p112
      $region46: #{iresidual_forward.3} parent=39 // pred_check_branch
        %688 = sbr.rel (%p686) target = $region48
      $region47: #{iresidual_forward.3} parent=39 // pred_region
        %p689 = scmp.lt.s32.totalorder %s16, 1
        %s690 = scalar_select %p689, %s16, 1
        %s691 = smul.addr %s690, 2
        %s692 = scalar_lea.vmem %s3, %s691
      $region48: #{iresidual_forward.3} parent=39 // pred_fallthru
        _
    $region40: #{iresidual_forward.3} parent=5 // pred_fallthru
      _
  $region6: #{iresidual_forward.3} parent=0 // loop_footer
    %s14 = sadd.s32 1, %s10
  $region7: #{iresidual_forward.3} parent=0 // loop_footer_branch
    %9 = sbr.rel target = $region3
  $region8: #{iresidual_forward.3} parent=0 // loop_exit
    _

// kernel: iresidual_forward.4
$region0: #{iresidual_forward.4}
  #allocation0 [shape = 'u32[]', space=smem, size = 0x4, offset = 0x4, fixed_abs, tag = 'smem constant byte address 0x4 - core index']
  #allocation1 [shape = 'u32[144,128]{1,0:T(1,128)}', space=vmem, size = 0x12000, scoped, tag = 'internal scratch']
  #allocation2 [shape = 'f32[4,18,128]{2,1,0:T(8,128)}', space=vmem, size = 0xc000, scoped, tag = 'scratch operand']
  %s0 = inlined_call_operand.vmem [shape: f32[8,16,128], index: 0, kind: input, shape index: {}]
  %s1 = inlined_call_operand.vmem [shape: f32[1,128], index: 1, kind: input, shape index: {}]
  %s2 = inlined_call_operand.vmem [shape: f32[1,128], index: 2, kind: input, shape index: {}]
  %s3 = inlined_call_operand.vmem [shape: f32[3,128,128], index: 3, kind: input, shape index: {}]
  %s4 = inlined_call_operand.vmem [shape: f32[8,16,128], index: 4, kind: output, shape index: {0}]
  %s5 = inlined_call_operand.vmem [shape: f32[2,2,128], index: 5, kind: output, shape index: {1}]
  %6 = xla_tuple %s4, %s5
  %s7 = sld [smem:[#allocation0]]
  $region57: #{iresidual_forward.4} parent=0
    _
  %s9 = ssub.s32 1, %s7
  %s10 = scalar_select 0, %s9, %s7
  loop: start=0, step=1, limit=4
  $region2: #{iresidual_forward.4} parent=0 // loop_pre_header
    _
  $region3: #{iresidual_forward.4} parent=0 // loop_header
    %s12 = sphi 0, %s16
    %p13 = scmp.ge.s32.totalorder %s12, 4
    %s22 = sphi 0, %s24
    %s25 = sphi 0, %s22
    %s26 = sphi 0, %s25
    %s42 = sphi 0, %s26
    %s46 = sphi 0, %s46
    %s48 = sphi 0, %s46
    %s49 = sphi 0, %s48
    %s63 = sphi 0, %s49
    %s67 = sphi 0, %s67
    %s69 = sphi 0, %s67
    %s70 = sphi 0, %s69
    %s84 = sphi 0, %s70
    %s88 = sphi 0, %s88
    %s90 = sphi 0, %s88
    %s91 = sphi 0, %s90
    %s105 = sphi 0, %s91
    %s111 = sphi 0, %s113
    %s114 = sphi 0, %s111
    %s115 = sphi 0, %s114
    %s131 = sphi 0, %s115
    %s137 = sphi 0, %s139
    %s140 = sphi 0, %s137
    %s141 = sphi 0, %s140
    %s157 = sphi 0, %s141
  $region4: #{iresidual_forward.4} parent=0 // loop_header_branch
    %15 = sbr.rel (%p13) target = $region8
  $region5: #{iresidual_forward.4} parent=0 // loop_body
    %s17 = ssub.s32 %s12, 1
    %s18 = ssub.s32 %s12, 2
    %s19 = sadd.s32 %s12, 1
    %s20 = ssub.s32 %s12, %s19
    %p21 = scmp.eq.s32.totalorder %s20, 0
    %s23 = sadd.s32 %s22, 1
    %s24 = scalar_select %p21, %s22, %s23
    %p27 = pneg %p21
    %p28 = scmp.eq.s32.totalorder %s12, 1
    %p29 = por %p27, %p28
    %p30 = scmp.ne.s32.totalorder %s22, %s25
    %p31 = scmp.eq.s32.totalorder %s12, 0
    %p32 = por %p30, %p31
    %p33 = scmp.ne.s32.totalorder %s22, %s25
    %p34 = scmp.eq.s32.totalorder %s17, 1
    %p35 = por %p33, %p34
    %p36 = scmp.ne.s32.totalorder %s25, %s26
    %p37 = scmp.eq.s32.totalorder %s17, 0
    %p38 = por %p36, %p37
    %p39 = scmp.ne.s32.totalorder %s25, %s26
    %p40 = scmp.eq.s32.totalorder %s18, 1
    %p41 = por %p39, %p40
    %p43 = scmp.ne.s32.totalorder %s26, %s42
    %p44 = scmp.eq.s32.totalorder %s18, 0
    %p45 = por %p43, %p44
    %s47 = sadd.s32 %s46, 1
    %p50 = scmp.eq.s32.totalorder %s12, 1
    %p51 = scmp.ne.s32.totalorder %s46, %s48
    %p52 = scmp.eq.s32.totalorder %s12, 0
    %p53 = por %p51, %p52
    %p54 = scmp.ne.s32.totalorder %s46, %s48
    %p55 = scmp.eq.s32.totalorder %s17, 1
    %p56 = por %p54, %p55
    %p57 = scmp.ne.s32.totalorder %s48, %s49
    %p58 = scmp.eq.s32.totalorder %s17, 0
    %p59 = por %p57, %p58
    %p60 = scmp.ne.s32.totalorder %s48, %s49
    %p61 = scmp.eq.s32.totalorder %s18, 1
    %p62 = por %p60, %p61
    %p64 = scmp.ne.s32.totalorder %s49, %s63
    %p65 = scmp.eq.s32.totalorder %s18, 0
    %p66 = por %p64, %p65
    %s68 = sadd.s32 %s67, 1
    %p71 = scmp.eq.s32.totalorder %s12, 1
    %p72 = scmp.ne.s32.totalorder %s67, %s69
    %p73 = scmp.eq.s32.totalorder %s12, 0
    %p74 = por %p72, %p73
    %p75 = scmp.ne.s32.totalorder %s67, %s69
    %p76 = scmp.eq.s32.totalorder %s17, 1
    %p77 = por %p75, %p76
    %p78 = scmp.ne.s32.totalorder %s69, %s70
    %p79 = scmp.eq.s32.totalorder %s17, 0
    %p80 = por %p78, %p79
    %p81 = scmp.ne.s32.totalorder %s69, %s70
    %p82 = scmp.eq.s32.totalorder %s18, 1
    %p83 = por %p81, %p82
    %p85 = scmp.ne.s32.totalorder %s70, %s84
    %p86 = scmp.eq.s32.totalorder %s18, 0
    %p87 = por %p85, %p86
    %s89 = sadd.s32 %s88, 1
    %p92 = scmp.eq.s32.totalorder %s12, 1
    %p93 = scmp.ne.s32.totalorder %s88, %s90
    %p94 = scmp.eq.s32.totalorder %s12, 0
    %p95 = por %p93, %p94
    %p96 = scmp.ne.s32.totalorder %s88, %s90
    %p97 = scmp.eq.s32.totalorder %s17, 1
    %p98 = por %p96, %p97
    %p99 = scmp.ne.s32.totalorder %s90, %s91
    %p100 = scmp.eq.s32.totalorder %s17, 0
    %p101 = por %p99, %p100
    %p102 = scmp.ne.s32.totalorder %s90, %s91
    %p103 = scmp.eq.s32.totalorder %s18, 1
    %p104 = por %p102, %p103
    %p106 = scmp.ne.s32.totalorder %s91, %s105
    %p107 = scmp.eq.s32.totalorder %s18, 0
    %p108 = por %p106, %p107
    %s109 = ssub.s32 %s12, %s19
    %p110 = scmp.eq.s32.totalorder %s109, 0
    %s112 = sadd.s32 %s111, 1
    %s113 = scalar_select %p110, %s111, %s112
    %p116 = pneg %p110
    %p117 = scmp.eq.s32.totalorder %s12, 1
    %p118 = por %p116, %p117
    %p119 = scmp.ne.s32.totalorder %s111, %s114
    %p120 = scmp.eq.s32.totalorder %s12, 0
    %p121 = por %p119, %p120
    %p122 = scmp.ne.s32.totalorder %s111, %s114
    %p123 = scmp.eq.s32.totalorder %s17, 1
    %p124 = por %p122, %p123
    %p125 = scmp.ne.s32.totalorder %s114, %s115
    %p126 = scmp.eq.s32.totalorder %s17, 0
    %p127 = por %p125, %p126
    %p128 = scmp.ne.s32.totalorder %s114, %s115
    %p129 = scmp.eq.s32.totalorder %s18, 1
    %p130 = por %p128, %p129
    %p132 = scmp.ne.s32.totalorder %s115, %s131
    %p133 = scmp.eq.s32.totalorder %s18, 0
    %p134 = por %p132, %p133
    %s135 = ssub.s32 %s12, %s19
    %p136 = scmp.eq.s32.totalorder %s135, 0
    %s138 = sadd.s32 %s137, 1
    %s139 = scalar_select %p136, %s137, %s138
    %p142 = pneg %p136
    %p143 = scmp.eq.s32.totalorder %s12, 1
    %p144 = por %p142, %p143
    %p145 = scmp.ne.s32.totalorder %s137, %s140
    %p146 = scmp.eq.s32.totalorder %s12, 0
    %p147 = por %p145, %p146
    %p148 = scmp.ne.s32.totalorder %s137, %s140
    %p149 = scmp.eq.s32.totalorder %s17, 1
    %p150 = por %p148, %p149
    %p151 = scmp.ne.s32.totalorder %s140, %s141
    %p152 = scmp.eq.s32.totalorder %s17, 0
    %p153 = por %p151, %p152
    %p154 = scmp.ne.s32.totalorder %s140, %s141
    %p155 = scmp.eq.s32.totalorder %s18, 1
    %p156 = por %p154, %p155
    %p158 = scmp.ne.s32.totalorder %s141, %s157
    %p159 = scmp.eq.s32.totalorder %s18, 0
    %p160 = por %p158, %p159
    %p161 = scmp.le.s32.totalorder 1, %s12
    %p162 = scmp.lt.s32.totalorder %s12, 3
    %p163 = pnand %p161, %p162
    %p164 = pneg %p163
    // Predicated region
    $region9: #{iresidual_forward.4} parent=5 // pred_check
      _
    $region10: #{iresidual_forward.4} parent=5 // pred_check_branch
      %166 = sbr.rel (%p163) target = $region12
    $region11: #{iresidual_forward.4} parent=5 // pred_region
      %s167 = ssub.s32 %s12, 1
      // Predicated region
      $region13: #{iresidual_forward.4} parent=11 // pred_check
        %p168 = pneg %p59
      $region14: #{iresidual_forward.4} parent=11 // pred_check_branch
        %170 = sbr.rel (%p168) target = $region16
      $region15: #{iresidual_forward.4} parent=11 // pred_region
        _
      $region16: #{iresidual_forward.4} parent=11 // pred_fallthru
        _
      // Predicated region
      $region17: #{iresidual_forward.4} parent=11 // pred_check
        %p171 = pneg %p80
      $region18: #{iresidual_forward.4} parent=11 // pred_check_branch
        %173 = sbr.rel (%p171) target = $region20
      $region19: #{iresidual_forward.4} parent=11 // pred_region
        _
      $region20: #{iresidual_forward.4} parent=11 // pred_fallthru
        _
      // Predicated region
      $region21: #{iresidual_forward.4} parent=11 // pred_check
        %p174 = pneg %p101
      $region22: #{iresidual_forward.4} parent=11 // pred_check_branch
        %176 = sbr.rel (%p174) target = $region24
      $region23: #{iresidual_forward.4} parent=11 // pred_region
        _
      $region24: #{iresidual_forward.4} parent=11 // pred_fallthru
        _
    $region12: #{iresidual_forward.4} parent=5 // pred_fallthru
      _
    %p177 = scmp.lt.s32.totalorder %s12, 2
    // Predicated region
    $region25: #{iresidual_forward.4} parent=5 // pred_check
      %p178 = pneg %p177
    $region26: #{iresidual_forward.4} parent=5 // pred_check_branch
      %180 = sbr.rel (%p178) target = $region28
    $region27: #{iresidual_forward.4} parent=5 // pred_region
      // Predicated region
      $region29: #{iresidual_forward.4} parent=27 // pred_check
        %p181 = pneg %p32
      $region30: #{iresidual_forward.4} parent=27 // pred_check_branch
        %183 = sbr.rel (%p181) target = $region32
      $region31: #{iresidual_forward.4} parent=27 // pred_region
        %s184 = smul.u32 4, %s12
        %p185 = scmp.lt.s32.totalorder %s184, 7
        %s186 = scalar_select %p185, %s184, 7
        %s187 = smul.addr %s186, 2
        %s188 = smul.addr %s187, 8
        %s189 = scalar_lea.vmem %s0, %s188
        %s190 = smul.u32 4, %s12
      $region32: #{iresidual_forward.4} parent=27 // pred_fallthru
        _
    $region28: #{iresidual_forward.4} parent=5 // pred_fallthru
      _
    %p191 = scmp.le.s32.totalorder 1, %s12
    %p192 = scmp.lt.s32.totalorder %s12, 3
    %p193 = pnand %p191, %p192
    %p194 = pneg %p193
    // Predicated region
    $region33: #{iresidual_forward.4} parent=5 // pred_check
      _
    $region34: #{iresidual_forward.4} parent=5 // pred_check_branch
      %196 = sbr.rel (%p193) target = $region36
    $region35: #{iresidual_forward.4} parent=5 // pred_region
      %s197 = ssub.s32 %s12, 1
      %s198 = smul.u32 4, %s17
      %p199 = scmp.lt.s32.totalorder %s198, 7
      %s200 = scalar_select %p199, %s198, 7
      %s201 = smul.addr %s200, 2
      %s202 = smul.addr %s201, 8
      %s203 = scalar_lea.vmem %s0, %s202
      %p204 = pneg %p38
      %p205 = pneg %p35
      %p206 = pneg %p59
      %p207 = pneg %p56
      %p208 = pneg %p80
      %p209 = pneg %p77
      %p210 = pneg %p101
      %p211 = pneg %p98
      %p212 = pneg %p127
      %p213 = pneg %p124
      %s214 = smul.u32 4, %s17
      %p215 = scmp.lt.s32.totalorder %s214, 7
      %s216 = scalar_select %p215, %s214, 7
      %s217 = smul.addr %s216, 2
      %s218 = smul.addr %s217, 8
      %s219 = scalar_lea.vmem %s4, %s218
      %p220 = pneg %p153
      %p221 = pneg %p150
      %p222 = scmp.lt.s32.totalorder %s17, 1
      %s223 = scalar_select %p222, %s17, 1
      %s224 = smul.addr %s223, 2
      %s225 = scalar_lea.vmem %s5, %s224
      %s226 = smul.u32 4, %s17
      %p227 = scmp.lt.s32.totalorder %s226, 7
      %s228 = scalar_select %p227, %s226, 7
      %s229 = smul.addr %s228, 2
      %s230 = smul.addr %s229, 8
      %s231 = scalar_lea.vmem %s0, %s230
      %s232 = smul.u32 4, %s17
      %s233 = smul.u32 4, %s17
      %p234 = scmp.lt.s32.totalorder %s233, 7
      %s235 = scalar_select %p234, %s233, 7
      %s236 = smul.addr %s235, 2
      %s237 = smul.addr %s236, 8
      %s238 = scalar_lea.vmem %s4, %s237
      %s239 = smul.u32 4, %s17
      %p240 = scmp.lt.s32.totalorder %s17, 1
      %s241 = scalar_select %p240, %s17, 1
      %s242 = smul.addr %s241, 2
      %s243 = scalar_lea.vmem %s5, %s242
      %v244 = vld [vmem:[%s231] sm:$0xff]
      %v245 = vld [vmem:[%s231 + $0x8] sm:$0xff]
      %v246 = vld [vmem:[%s231 + $0x10] sm:$0xff]
      %v247 = vld [vmem:[%s231 + $0x18] sm:$0xff]
      %v248 = vld [vmem:[%s231 + $0x20] sm:$0xff]
      %v249 = vld [vmem:[%s231 + $0x28] sm:$0xff]
      %v250 = vld [vmem:[%s231 + $0x30] sm:$0xff]
      %v251 = vld [vmem:[%s231 + $0x38] sm:$0xff]
      %v252 = vld [vmem:[%s1] sm:$0x1]
      %v254 = vlaneseq
      %v255 = vshrl.u32 %v254, 7
      %v256 = vsub.s32 0, %v255
      %v257 = vrot.slane %v252, %v256
      %v259 = vmul.f32 %v244, %v257
      %v260 = vmul.f32 %v245, %v257
      %v261 = vmul.f32 %v246, %v257
      %v262 = vmul.f32 %v247, %v257
      %v263 = vmul.f32 %v248, %v257
      %v264 = vmul.f32 %v249, %v257
      %v265 = vmul.f32 %v250, %v257
      %v266 = vmul.f32 %v251, %v257
      %v267 = vld [vmem:[%s2] sm:$0x1]
      %v269 = vlaneseq
      %v270 = vshrl.u32 %v269, 7
      %v271 = vsub.s32 0, %v270
      %v272 = vrot.slane %v267, %v271
      %v274 = vadd.f32 %v259, %v272
      %v275 = vadd.f32 %v260, %v272
      %v276 = vadd.f32 %v261, %v272
      %v277 = vadd.f32 %v262, %v272
      %v278 = vadd.f32 %v263, %v272
      %v279 = vadd.f32 %v264, %v272
      %v280 = vadd.f32 %v265, %v272
      %v281 = vadd.f32 %v266, %v272
      %vm282 = vcmp.gt.f32.partialorder %v274, 0.0
      %vm283 = vcmp.gt.f32.partialorder %v275, 0.0
      %vm284 = vcmp.gt.f32.partialorder %v276, 0.0
      %vm285 = vcmp.gt.f32.partialorder %v277, 0.0
      %vm286 = vcmp.gt.f32.partialorder %v278, 0.0
      %vm287 = vcmp.gt.f32.partialorder %v279, 0.0
      %vm288 = vcmp.gt.f32.partialorder %v280, 0.0
      %vm289 = vcmp.gt.f32.partialorder %v281, 0.0
      %v290 = vmul.f32 %v274, 0.01
      %v291 = vmul.f32 %v275, 0.01
      %v292 = vmul.f32 %v276, 0.01
      %v293 = vmul.f32 %v277, 0.01
      %v294 = vmul.f32 %v278, 0.01
      %v295 = vmul.f32 %v279, 0.01
      %v296 = vmul.f32 %v280, 0.01
      %v297 = vmul.f32 %v281, 0.01
      %v298 = vsel %vm282, %v274, %v290
      %v299 = vsel %vm283, %v275, %v291
      %v300 = vsel %vm284, %v276, %v292
      %v301 = vsel %vm285, %v277, %v293
      %v302 = vsel %vm286, %v278, %v294
      %v303 = vsel %vm287, %v279, %v295
      %v304 = vsel %vm288, %v280, %v296
      %v305 = vsel %vm289, %v281, %v297
      %306 = vst [vmem:[#allocation2] sm:$0x1] 0.0
      %307 = vst [vmem:[#allocation2 + $0x18] sm:$0x1] 0.0
      %308 = vst [vmem:[#allocation2 + $0x30] sm:$0x1] 0.0
      %309 = vst [vmem:[#allocation2 + $0x48] sm:$0x1] 0.0
      %310 = vst [vmem:[#allocation2 + $0x11] sm:$0x1] 0.0
      %311 = vst [vmem:[#allocation2 + $0x29] sm:$0x1] 0.0
      %312 = vst [vmem:[#allocation2 + $0x41] sm:$0x1] 0.0
      %313 = vst [vmem:[#allocation2 + $0x59] sm:$0x1] 0.0
      %314 = vst [vmem:[#allocation2 + $0x1] sm:$0xff] %v298
      %315 = vst [vmem:[#allocation2 + $0x9] sm:$0xff] %v299
      %316 = vst [vmem:[#allocation2 + $0x19] sm:$0xff] %v300
      %317 = vst [vmem:[#allocation2 + $0x21] sm:$0xff] %v301
      %318 = vst [vmem:[#allocation2 + $0x31] sm:$0xff] %v302
      %319 = vst [vmem:[#allocation2 + $0x39] sm:$0xff] %v303
      %320 = vst [vmem:[#allocation2 + $0x49] sm:$0xff] %v304
      %321 = vst [vmem:[#allocation2 + $0x51] sm:$0xff] %v305
      %v322 = vld [vmem:[#allocation2] sm:$0xff]
      %v323 = vld [vmem:[#allocation2 + $0x8] sm:$0xff]
      %v324 = vld [vmem:[#allocation2 + $0x18] sm:$0xff]
      %v325 = vld [vmem:[#allocation2 + $0x20] sm:$0xff]
      %v326 = vld [vmem:[#allocation2 + $0x30] sm:$0xff]
      %v327 = vld [vmem:[#allocation2 + $0x38] sm:$0xff]
      %v328 = vld [vmem:[#allocation2 + $0x48] sm:$0xff]
      %v329 = vld [vmem:[#allocation2 + $0x50] sm:$0xff]
      %v330 = vld [vmem:[%s3] sm:$0xff]
      %v331 = vld [vmem:[%s3 + $0x8] sm:$0xff]
      %v332 = vld [vmem:[%s3 + $0x10] sm:$0xff]
      %v333 = vld [vmem:[%s3 + $0x18] sm:$0xff]
      %v334 = vld [vmem:[%s3 + $0x20] sm:$0xff]
      %v335 = vld [vmem:[%s3 + $0x28] sm:$0xff]
      %v336 = vld [vmem:[%s3 + $0x30] sm:$0xff]
      %v337 = vld [vmem:[%s3 + $0x38] sm:$0xff]
      %v338 = vld [vmem:[%s3 + $0x40] sm:$0xff]
      %v339 = vld [vmem:[%s3 + $0x48] sm:$0xff]
      %v340 = vld [vmem:[%s3 + $0x50] sm:$0xff]
      %v341 = vld [vmem:[%s3 + $0x58] sm:$0xff]
      %v342 = vld [vmem:[%s3 + $0x60] sm:$0xff]
      %v343 = vld [vmem:[%s3 + $0x68] sm:$0xff]
      %v344 = vld [vmem:[%s3 + $0x70] sm:$0xff]
      %v345 = vld [vmem:[%s3 + $0x78] sm:$0xff]
      %v346 = vld [vmem:[#allocation2 + $0x1] sm:$0xff]
      %v347 = vld [vmem:[#allocation2 + $0x9] sm:$0xff]
      %v348 = vld [vmem:[#allocation2 + $0x19] sm:$0xff]
      %v349 = vld [vmem:[#allocation2 + $0x21] sm:$0xff]
      %v350 = vld [vmem:[#allocation2 + $0x31] sm:$0xff]
      %v351 = vld [vmem:[#allocation2 + $0x39] sm:$0xff]
      %v352 = vld [vmem:[#allocation2 + $0x49] sm:$0xff]
      %v353 = vld [vmem:[#allocation2 + $0x51] sm:$0xff]
      %s354 = scalar_lea.vmem %s3, 128
      %v355 = vld [vmem:[%s354] sm:$0xff]
      %v356 = vld [vmem:[%s354 + $0x8] sm:$0xff]
      %v357 = vld [vmem:[%s354 + $0x10] sm:$0xff]
      %v358 = vld [vmem:[%s354 + $0x18] sm:$0xff]
      %v359 = vld [vmem:[%s354 + $0x20] sm:$0xff]
      %v360 = vld [vmem:[%s354 + $0x28] sm:$0xff]
      %v361 = vld [vmem:[%s354 + $0x30] sm:$0xff]
      %v362 = vld [vmem:[%s354 + $0x38] sm:$0xff]
      %v363 = vld [vmem:[%s354 + $0x40] sm:$0xff]
      %v364 = vld [vmem:[%s354 + $0x48] sm:$0xff]
      %v365 = vld [vmem:[%s354 + $0x50] sm:$0xff]
      %v366 = vld [vmem:[%s354 + $0x58] sm:$0xff]
      %v367 = vld [vmem:[%s354 + $0x60] sm:$0xff]
      %v368 = vld [vmem:[%s354 + $0x68] sm:$0xff]
      %v369 = vld [vmem:[%s354 + $0x70] sm:$0xff]
      %v370 = vld [vmem:[%s354 + $0x78] sm:$0xff]
      %371 = vmatprep.subr.mxu0 0.0
      %372 = vmatpush1.msra.mxu0 %v355
      %373 = vmatprep.subr.mxu0 0.0
      %374 = vmatpush1.msra.mxu0 %v356
      %375 = vmatprep.subr.mxu0 0.0
      %376 = vmatpush1.msra.mxu0 %v357
      %377 = vmatprep.subr.mxu0 0.0
      %378 = vmatpush1.msra.mxu0 %v358
      %379 = vmatprep.subr.mxu0 0.0
      %380 = vmatpush1.msra.mxu0 %v359
      %381 = vmatprep.subr.mxu0 0.0
      %382 = vmatpush1.msra.mxu0 %v360
      %383 = vmatprep.subr.mxu0 0.0
      %384 = vmatpush1.msra.mxu0 %v361
      %385 = vmatprep.subr.mxu0 0.0
      %386 = vmatpush1.msra.mxu0 %v362
      %387 = vmatprep.subr.mxu0 0.0
      %388 = vmatpush1.msra.mxu0 %v363
      %389 = vmatprep.subr.mxu0 0.0
      %390 = vmatpush1.msra.mxu0 %v364
      %391 = vmatprep.subr.mxu0 0.0
      %392 = vmatpush1.msra.mxu0 %v365
      %393 = vmatprep.subr.mxu0 0.0
      %394 = vmatpush1.msra.mxu0 %v366
      %395 = vmatprep.subr.mxu0 0.0
      %396 = vmatpush1.msra.mxu0 %v367
      %397 = vmatprep.subr.mxu0 0.0
      %398 = vmatpush1.msra.mxu0 %v368
      %399 = vmatprep.subr.mxu0 0.0
      %400 = vmatpush1.msra.mxu0 %v369
      %401 = vmatprep.subr.mxu0 0.0
      %402 = vmatpush1.msra.mxu0 %v370
      %403 = vmatprep.subr.mxu0 0.0
      %404 = vmatpush1.msra.mxu0 0.0
      %405 = vmatprep.subr.mxu0 0.0
      %406 = vmatpush1.msra.mxu0 0.0
      %407 = vmatprep.subr.mxu0 0.0
      %408 = vmatpush1.msra.mxu0 0.0
      %409 = vmatprep.subr.mxu0 0.0
      %410 = vmatpush1.msra.mxu0 0.0
      %411 = vmatprep.subr.mxu0 0.0
      %412 = vmatpush1.msra.mxu0 0.0
      %413 = vmatprep.subr.mxu0 0.0
      %414 = vmatpush1.msra.mxu0 0.0
      %415 = vmatprep.subr.mxu0 0.0
      %416 = vmatpush1.msra.mxu0 0.0
      %417 = vmatprep.subr.mxu0 0.0
      %418 = vmatpush1.msra.mxu0 0.0
      %419 = vmatprep.subr.mxu0 0.0
      %420 = vmatpush1.msra.mxu0 0.0
      %421 = vmatprep.subr.mxu0 0.0
      %422 = vmatpush1.msra.mxu0 0.0
      %423 = vmatprep.subr.mxu0 0.0
      %424 = vmatpush1.msra.mxu0 0.0
      %425 = vmatprep.subr.mxu0 0.0
      %426 = vmatpush1.msra.mxu0 0.0
      %427 = vmatprep.subr.mxu0 0.0
      %428 = vmatpush1.msra.mxu0 0.0
      %429 = vmatprep.subr.mxu0 0.0
      %430 = vmatpush1.msra.mxu0 0.0
      %431 = vmatprep.subr.mxu0 0.0
      %432 = vmatpush1.msra.mxu0 0.0
      %433 = vmatprep.subr.mxu0 0.0
      %434 = vmatpush1.msra.mxu0 0.0
      %435 = vmatprep.mubr.f32.mxu0 0.0
      %436 = vmatmul.mubr.f32.gmra.mrb[0].mxu0 %v346
      %v437 = vpop.f32.mrb[0].mxu0
      %v438 = vadd.f32 0.0, %v437
      %v439 = vpop.f32.mrb[0].mxu0
      %440 = vmatprep.mubr.f32.mxu0 0.0
      %441 = vmatmul.mubr.f32.gmra.mrb[0].mxu0 %v347
      %v442 = vpop.f32.mrb[0].mxu0
      %v443 = vadd.f32 0.0, %v442
      %v444 = vpop.f32.mrb[0].mxu0
      %445 = vmatprep.mubr.f32.mxu0 0.0
      %446 = vmatmul.mubr.f32.gmra.mrb[0].mxu0 %v348
      %v447 = vpop.f32.mrb[0].mxu0
      %v448 = vadd.f32 0.0, %v447
      %v449 = vpop.f32.mrb[0].mxu0
      %450 = vmatprep.mubr.f32.mxu0 0.0
      %451 = vmatmul.mubr.f32.gmra.mrb[0].mxu0 %v349
      %v452 = vpop.f32.mrb[0].mxu0
      %v453 = vadd.f32 0.0, %v452
      %v454 = vpop.f32.mrb[0].mxu0
      %455 = vmatprep.mubr.f32.mxu0 0.0
      %456 = vmatmul.mubr.f32.gmra.mrb[0].mxu0 %v350
      %v457 = vpop.f32.mrb[0].mxu0
      %v458 = vadd.f32 0.0, %v457
      %v459 = vpop.f32.mrb[0].mxu0
      %460 = vmatprep.mubr.f32.mxu0 0.0
      %461 = vmatmul.mubr.f32.gmra.mrb[0].mxu0 %v351
      %v462 = vpop.f32.mrb[0].mxu0
      %v463 = vadd.f32 0.0, %v462
      %v464 = vpop.f32.mrb[0].mxu0
      %465 = vmatprep.mubr.f32.mxu0 0.0
      %466 = vmatmul.mubr.f32.gmra.mrb[0].mxu0 %v352
      %v467 = vpop.f32.mrb[0].mxu0
      %v468 = vadd.f32 0.0, %v467
      %v469 = vpop.f32.mrb[0].mxu0
      %470 = vmatprep.mubr.f32.mxu0 0.0
      %471 = vmatmul.mubr.f32.gmra.mrb[0].mxu0 %v353
      %v472 = vpop.f32.mrb[0].mxu0
      %v473 = vadd.f32 0.0, %v472
      %v474 = vpop.f32.mrb[0].mxu0
      %475 = vdwg.mxu0
      %476 = vmatprep.subr.mxu0 0.0
      %477 = vmatpush1.msra.mxu0 %v330
      %478 = vmatprep.subr.mxu0 0.0
      %479 = vmatpush1.msra.mxu0 %v331
      %480 = vmatprep.subr.mxu0 0.0
      %481 = vmatpush1.msra.mxu0 %v332
      %482 = vmatprep.subr.mxu0 0.0
      %483 = vmatpush1.msra.mxu0 %v333
      %484 = vmatprep.subr.mxu0 0.0
      %485 = vmatpush1.msra.mxu0 %v334
      %486 = vmatprep.subr.mxu0 0.0
      %487 = vmatpush1.msra.mxu0 %v335
      %488 = vmatprep.subr.mxu0 0.0
      %489 = vmatpush1.msra.mxu0 %v336
      %490 = vmatprep.subr.mxu0 0.0
      %491 = vmatpush1.msra.mxu0 %v337
      %492 = vmatprep.subr.mxu0 0.0
      %493 = vmatpush1.msra.mxu0 %v338
      %494 = vmatprep.subr.mxu0 0.0
      %495 = vmatpush1.msra.mxu0 %v339
      %496 = vmatprep.subr.mxu0 0.0
      %497 = vmatpush1.msra.mxu0 %v340
      %498 = vmatprep.subr.mxu0 0.0
      %499 = vmatpush1.msra.mxu0 %v341
      %500 = vmatprep.subr.mxu0 0.0
      %501 = vmatpush1.msra.mxu0 %v342
      %502 = vmatprep.subr.mxu0 0.0
      %503 = vmatpush1.msra.mxu0 %v343
      %504 = vmatprep.subr.mxu0 0.0
      %505 = vmatpush1.msra.mxu0 %v344
      %506 = vmatprep.subr.mxu0 0.0
      %507 = vmatpush1.msra.mxu0 %v345
      %508 = vmatprep.subr.mxu0 0.0
      %509 = vmatpush1.msra.mxu0 0.0
      %510 = vmatprep.subr.mxu0 0.0
      %511 = vmatpush1.msra.mxu0 0.0
      %512 = vmatprep.subr.mxu0 0.0
      %513 = vmatpush1.msra.mxu0 0.0
      %514 = vmatprep.subr.mxu0 0.0
      %515 = vmatpush1.msra.mxu0 0.0
      %516 = vmatprep.subr.mxu0 0.0
      %517 = vmatpush1.msra.mxu0 0.0
      %518 = vmatprep.subr.mxu0 0.0
      %519 = vmatpush1.msra.mxu0 0.0
      %520 = vmatprep.subr.mxu0 0.0
      %521 = vmatpush1.msra.mxu0 0.0
      %522 = vmatprep.subr.mxu0 0.0
      %523 = vmatpush1.msra.mxu0 0.0
      %524 = vmatprep.subr.mxu0 0.0
      %525 = vmatpush1.msra.mxu0 0.0
      %526 = vmatprep.subr.mxu0 0.0
      %527 = vmatpush1.msra.mxu0 0.0
      %528 = vmatprep.subr.mxu0 0.0
      %529 = vmatpush1.msra.mxu0 0.0
      %530 = vmatprep.subr.mxu0 0.0
      %531 = vmatpush1.msra.mxu0 0.0
      %532 = vmatprep.subr.mxu0 0.0
      %533 = vmatpush1.msra.mxu0 0.0
      %534 = vmatprep.subr.mxu0 0.0
      %535 = vmatpush1.msra.mxu0 0.0
      %536 = vmatprep.subr.mxu0 0.0
      %537 = vmatpush1.msra.mxu0 0.0
      %538 = vmatprep.subr.mxu0 0.0
      %539 = vmatpush1.msra.mxu0 0.0
      %540 = vmatprep.mubr.f32.mxu0 0.0
      %541 = vmatmul.mubr.f32.gmra.mrb[0].mxu0 %v322
      %v542 = vpop.f32.mrb[0].mxu0
      %v543 = vadd.f32 %v438, %v542
      %v544 = vpop.f32.mrb[0].mxu0
      %545 = vmatprep.mubr.f32.mxu0 0.0
      %546 = vmatmul.mubr.f32.gmra.mrb[0].mxu0 %v323
      %v547 = vpop.f32.mrb[0].mxu0
      %v548 = vadd.f32 %v443, %v547
      %v549 = vpop.f32.mrb[0].mxu0
      %550 = vmatprep.mubr.f32.mxu0 0.0
      %551 = vmatmul.mubr.f32.gmra.mrb[0].mxu0 %v324
      %v552 = vpop.f32.mrb[0].mxu0
      %v553 = vadd.f32 %v448, %v552
      %v554 = vpop.f32.mrb[0].mxu0
      %555 = vmatprep.mubr.f32.mxu0 0.0
      %556 = vmatmul.mubr.f32.gmra.mrb[0].mxu0 %v325
      %v557 = vpop.f32.mrb[0].mxu0
      %v558 = vadd.f32 %v453, %v557
      %v559 = vpop.f32.mrb[0].mxu0
      %560 = vmatprep.mubr.f32.mxu0 0.0
      %561 = vmatmul.mubr.f32.gmra.mrb[0].mxu0 %v326
      %v562 = vpop.f32.mrb[0].mxu0
      %v563 = vadd.f32 %v458, %v562
      %v564 = vpop.f32.mrb[0].mxu0
      %565 = vmatprep.mubr.f32.mxu0 0.0
      %566 = vmatmul.mubr.f32.gmra.mrb[0].mxu0 %v327
      %v567 = vpop.f32.mrb[0].mxu0
      %v568 = vadd.f32 %v463, %v567
      %v569 = vpop.f32.mrb[0].mxu0
      %570 = vmatprep.mubr.f32.mxu0 0.0
      %571 = vmatmul.mubr.f32.gmra.mrb[0].mxu0 %v328
      %v572 = vpop.f32.mrb[0].mxu0
      %v573 = vadd.f32 %v468, %v572
      %v574 = vpop.f32.mrb[0].mxu0
      %575 = vmatprep.mubr.f32.mxu0 0.0
      %576 = vmatmul.mubr.f32.gmra.mrb[0].mxu0 %v329
      %v577 = vpop.f32.mrb[0].mxu0
      %v578 = vadd.f32 %v473, %v577
      %v579 = vpop.f32.mrb[0].mxu0
      %580 = vdwg.mxu0
      %v581 = vld [vmem:[#allocation2 + $0x2] sm:$0xff]
      %v582 = vld [vmem:[#allocation2 + $0xa] sm:$0xff]
      %v583 = vld [vmem:[#allocation2 + $0x1a] sm:$0xff]
      %v584 = vld [vmem:[#allocation2 + $0x22] sm:$0xff]
      %v585 = vld [vmem:[#allocation2 + $0x32] sm:$0xff]
      %v586 = vld [vmem:[#allocation2 + $0x3a] sm:$0xff]
      %v587 = vld [vmem:[#allocation2 + $0x4a] sm:$0xff]
      %v588 = vld [vmem:[#allocation2 + $0x52] sm:$0xff]
      %s589 = scalar_lea.vmem %s3, 256
      %v590 = vld [vmem:[%s589] sm:$0xff]
      %v591 = vld [vmem:[%s589 + $0x8] sm:$0xff]
      %v592 = vld [vmem:[%s589 + $0x10] sm:$0xff]
      %v593 = vld [vmem:[%s589 + $0x18] sm:$0xff]
      %v594 = vld [vmem:[%s589 + $0x20] sm:$0xff]
      %v595 = vld [vmem:[%s589 + $0x28] sm:$0xff]
      %v596 = vld [vmem:[%s589 + $0x30] sm:$0xff]
      %v597 = vld [vmem:[%s589 + $0x38] sm:$0xff]
      %v598 = vld [vmem:[%s589 + $0x40] sm:$0xff]
      %v599 = vld [vmem:[%s589 + $0x48] sm:$0xff]
      %v600 = vld [vmem:[%s589 + $0x50] sm:$0xff]
      %v601 = vld [vmem:[%s589 + $0x58] sm:$0xff]
      %v602 = vld [vmem:[%s589 + $0x60] sm:$0xff]
      %v603 = vld [vmem:[%s589 + $0x68] sm:$0xff]
      %v604 = vld [vmem:[%s589 + $0x70] sm:$0xff]
      %v605 = vld [vmem:[%s589 + $0x78] sm:$0xff]
      %606 = vmatprep.subr.mxu0 0.0
      %607 = vmatpush1.msra.mxu0 %v590
      %608 = vmatprep.subr.mxu0 0.0
      %609 = vmatpush1.msra.mxu0 %v591
      %610 = vmatprep.subr.mxu0 0.0
      %611 = vmatpush1.msra.mxu0 %v592
      %612 = vmatprep.subr.mxu0 0.0
      %613 = vmatpush1.msra.mxu0 %v593
      %614 = vmatprep.subr.mxu0 0.0
      %615 = vmatpush1.msra.mxu0 %v594
      %616 = vmatprep.subr.mxu0 0.0
      %617 = vmatpush1.msra.mxu0 %v595
      %618 = vmatprep.subr.mxu0 0.0
      %619 = vmatpush1.msra.mxu0 %v596
      %620 = vmatprep.subr.mxu0 0.0
      %621 = vmatpush1.msra.mxu0 %v597
      %622 = vmatprep.subr.mxu0 0.0
      %623 = vmatpush1.msra.mxu0 %v598
      %624 = vmatprep.subr.mxu0 0.0
      %625 = vmatpush1.msra.mxu0 %v599
      %626 = vmatprep.subr.mxu0 0.0
      %627 = vmatpush1.msra.mxu0 %v600
      %628 = vmatprep.subr.mxu0 0.0
      %629 = vmatpush1.msra.mxu0 %v601
      %630 = vmatprep.subr.mxu0 0.0
      %631 = vmatpush1.msra.mxu0 %v602
      %632 = vmatprep.subr.mxu0 0.0
      %633 = vmatpush1.msra.mxu0 %v603
      %634 = vmatprep.subr.mxu0 0.0
      %635 = vmatpush1.msra.mxu0 %v604
      %636 = vmatprep.subr.mxu0 0.0
      %637 = vmatpush1.msra.mxu0 %v605
      %638 = vmatprep.subr.mxu0 0.0
      %639 = vmatpush1.msra.mxu0 0.0
      %640 = vmatprep.subr.mxu0 0.0
      %641 = vmatpush1.msra.mxu0 0.0
      %642 = vmatprep.subr.mxu0 0.0
      %643 = vmatpush1.msra.mxu0 0.0
      %644 = vmatprep.subr.mxu0 0.0
      %645 = vmatpush1.msra.mxu0 0.0
      %646 = vmatprep.subr.mxu0 0.0
      %647 = vmatpush1.msra.mxu0 0.0
      %648 = vmatprep.subr.mxu0 0.0
      %649 = vmatpush1.msra.mxu0 0.0
      %650 = vmatprep.subr.mxu0 0.0
      %651 = vmatpush1.msra.mxu0 0.0
      %652 = vmatprep.subr.mxu0 0.0
      %653 = vmatpush1.msra.mxu0 0.0
      %654 = vmatprep.subr.mxu0 0.0
      %655 = vmatpush1.msra.mxu0 0.0
      %656 = vmatprep.subr.mxu0 0.0
      %657 = vmatpush1.msra.mxu0 0.0
      %658 = vmatprep.subr.mxu0 0.0
      %659 = vmatpush1.msra.mxu0 0.0
      %660 = vmatprep.subr.mxu0 0.0
      %661 = vmatpush1.msra.mxu0 0.0
      %662 = vmatprep.subr.mxu0 0.0
      %663 = vmatpush1.msra.mxu0 0.0
      %664 = vmatprep.subr.mxu0 0.0
      %665 = vmatpush1.msra.mxu0 0.0
      %666 = vmatprep.subr.mxu0 0.0
      %667 = vmatpush1.msra.mxu0 0.0
      %668 = vmatprep.subr.mxu0 0.0
      %669 = vmatpush1.msra.mxu0 0.0
      %670 = vmatprep.mubr.f32.mxu0 0.0
      %671 = vmatmul.mubr.f32.gmra.mrb[0].mxu0 %v581
      %v672 = vpop.f32.mrb[0].mxu0
      %v673 = vadd.f32 0.0, %v672
      %v674 = vpop.f32.mrb[0].mxu0
      %675 = vmatprep.mubr.f32.mxu0 0.0
      %676 = vmatmul.mubr.f32.gmra.mrb[0].mxu0 %v582
      %v677 = vpop.f32.mrb[0].mxu0
      %v678 = vadd.f32 0.0, %v677
      %v679 = vpop.f32.mrb[0].mxu0
      %680 = vmatprep.mubr.f32.mxu0 0.0
      %681 = vmatmul.mubr.f32.gmra.mrb[0].mxu0 %v583
      %v682 = vpop.f32.mrb[0].mxu0
      %v683 = vadd.f32 0.0, %v682
      %v684 = vpop.f32.mrb[0].mxu0
      %685 = vmatprep.mubr.f32.mxu0 0.0
      %686 = vmatmul.mubr.f32.gmra.mrb[0].mxu0 %v584
      %v687 = vpop.f32.mrb[0].mxu0
      %v688 = vadd.f32 0.0, %v687
      %v689 = vpop.f32.mrb[0].mxu0
      %690 = vmatprep.mubr.f32.mxu0 0.0
      %691 = vmatmul.mubr.f32.gmra.mrb[0].mxu0 %v585
      %v692 = vpop.f32.mrb[0].mxu0
      %v693 = vadd.f32 0.0, %v692
      %v694 = vpop.f32.mrb[0].mxu0
      %695 = vmatprep.mubr.f32.mxu0 0.0
      %696 = vmatmul.mubr.f32.gmra.mrb[0].mxu0 %v586
      %v697 = vpop.f32.mrb[0].mxu0
      %v698 = vadd.f32 0.0, %v697
      %v699 = vpop.f32.mrb[0].mxu0
      %700 = vmatprep.mubr.f32.mxu0 0.0
      %701 = vmatmul.mubr.f32.gmra.mrb[0].mxu0 %v587
      %v702 = vpop.f32.mrb[0].mxu0
      %v703 = vadd.f32 0.0, %v702
      %v704 = vpop.f32.mrb[0].mxu0
      %705 = vmatprep.mubr.f32.mxu0 0.0
      %706 = vmatmul.mubr.f32.gmra.mrb[0].mxu0 %v588
      %v707 = vpop.f32.mrb[0].mxu0
      %v708 = vadd.f32 0.0, %v707
      %v709 = vpop.f32.mrb[0].mxu0
      %710 = vdwg.mxu0
      %v711 = vadd.f32 %v543, %v673
      %v712 = vadd.f32 %v548, %v678
      %v713 = vadd.f32 %v553, %v683
      %v714 = vadd.f32 %v558, %v688
      %v715 = vadd.f32 %v563, %v693
      %v716 = vadd.f32 %v568, %v698
      %v717 = vadd.f32 %v573, %v703
      %v718 = vadd.f32 %v578, %v708
      %v719 = vadd.f32 %v711, %v712
      %v720 = vadd.f32 %v719, %v713
      %v721 = vadd.f32 %v720, %v714
      %v722 = vadd.f32 %v721, %v715
      %v723 = vadd.f32 %v722, %v716
      %v724 = vadd.f32 %v723, %v717
      %v725 = vadd.f32 %v724, %v718
      %v726 = vrot.slane %v725, 4
      %v727 = vadd.f32 %v725, %v726
      %v728 = vrot.slane %v727, 2
      %v729 = vadd.f32 %v727, %v728
      %v730 = vrot.slane %v729, 1
      %v731 = vadd.f32 %v729, %v730
      %v732 = vmul.f32 %v711, %v711
      %v733 = vmul.f32 %v712, %v712
      %v734 = vmul.f32 %v713, %v713
      %v735 = vmul.f32 %v714, %v714
      %v736 = vmul.f32 %v715, %v715
      %v737 = vmul.f32 %v716, %v716
      %v738 = vmul.f32 %v717, %v717
      %v739 = vmul.f32 %v718, %v718
      %v740 = vadd.f32 %v732, %v733
      %v741 = vadd.f32 %v740, %v734
      %v742 = vadd.f32 %v741, %v735
      %v743 = vadd.f32 %v742, %v736
      %v744 = vadd.f32 %v743, %v737
      %v745 = vadd.f32 %v744, %v738
      %v746 = vadd.f32 %v745, %v739
      %v747 = vrot.slane %v746, 4
      %v748 = vadd.f32 %v746, %v747
      %v749 = vrot.slane %v748, 2
      %v750 = vadd.f32 %v748, %v749
      %v751 = vrot.slane %v750, 1
      %v752 = vadd.f32 %v750, %v751
      %753 = vst [vmem:[%s243] sm:$0x1] %v731
      %754 = vst [vmem:[%s243 + $0x1] sm:$0x1] %v752
      %755 = vst [vmem:[%s238] sm:$0xff] %v711
      %756 = vst [vmem:[%s238 + $0x8] sm:$0xff] %v712
      %757 = vst [vmem:[%s238 + $0x10] sm:$0xff] %v713
      %758 = vst [vmem:[%s238 + $0x18] sm:$0xff] %v714
      %759 = vst [vmem:[%s238 + $0x20] sm:$0xff] %v715
      %760 = vst [vmem:[%s238 + $0x28] sm:$0xff] %v716
      %761 = vst [vmem:[%s238 + $0x30] sm:$0xff] %v717
      %762 = vst [vmem:[%s238 + $0x38] sm:$0xff] %v718
      %s763 = smul.u32 4, %s17
      %p764 = scmp.lt.s32.totalorder %s763, 7
      %s765 = scalar_select %p764, %s763, 7
      %s766 = smul.addr %s765, 2
      %s767 = smul.addr %s766, 8
      %s768 = scalar_lea.vmem %s4, %s767
      %p769 = scmp.lt.s32.totalorder %s17, 1
      %s770 = scalar_select %p769, %s17, 1
      %s771 = smul.addr %s770, 2
      %s772 = scalar_lea.vmem %s5, %s771
      // Predicated region
      $region37: #{iresidual_forward.4} parent=35 // pred_check
        %p773 = pneg %p124
      $region38: #{iresidual_forward.4} parent=35 // pred_check_branch
        %775 = sbr.rel (%p773) target = $region40
      $region39: #{iresidual_forward.4} parent=35 // pred_region
        %s776 = smul.u32 4, %s17
      $region40: #{iresidual_forward.4} parent=35 // pred_fallthru
        _
      // Predicated region
      $region41: #{iresidual_forward.4} parent=35 // pred_check
        %p777 = pneg %p150
      $region42: #{iresidual_forward.4} parent=35 // pred_check_branch
        %779 = sbr.rel (%p777) target = $region44
      $region43: #{iresidual_forward.4} parent=35 // pred_region
        _
      $region44: #{iresidual_forward.4} parent=35 // pred_fallthru
        _
    $region36: #{iresidual_forward.4} parent=5 // pred_fallthru
      _
    %p780 = scmp.le.s32.totalorder 2, %s12
    // Predicated region
    $region45: #{iresidual_forward.4} parent=5 // pred_check
      %p781 = pneg %p780
    $region46: #{iresidual_forward.4} parent=5 // pred_check_branch
      %783 = sbr.rel (%p781) target = $region48
    $region47: #{iresidual_forward.4} parent=5 // pred_region
      %s784 = ssub.s32 %s12, 2
      // Predicated region
      $region49: #{iresidual_forward.4} parent=47 // pred_check
        %p785 = pneg %p130
      $region50: #{iresidual_forward.4} parent=47 // pred_check_branch
        %787 = sbr.rel (%p785) target = $region52
      $region51: #{iresidual_forward.4} parent=47 // pred_region
        %s788 = smul.u32 4, %s18
        %p789 = scmp.lt.s32.totalorder %s788, 7
        %s790 = scalar_select %p789, %s788, 7
        %s791 = smul.addr %s790, 2
        %s792 = smul.addr %s791, 8
        %s793 = scalar_lea.vmem %s4, %s792
      $region52: #{iresidual_forward.4} parent=47 // pred_fallthru
        _
      // Predicated region
      $region53: #{iresidual_forward.4} parent=47 // pred_check
        %p794 = pneg %p156
      $region54: #{iresidual_forward.4} parent=47 // pred_check_branch
        %796 = sbr.rel (%p794) target = $region56
      $region55: #{iresidual_forward.4} parent=47 // pred_region
        %p797 = scmp.lt.s32.totalorder %s18, 1
        %s798 = scalar_select %p797, %s18, 1
        %s799 = smul.addr %s798, 2
        %s800 = scalar_lea.vmem %s5, %s799
      $region56: #{iresidual_forward.4} parent=47 // pred_fallthru
        _
    $region48: #{iresidual_forward.4} parent=5 // pred_fallthru
      _
  $region6: #{iresidual_forward.4} parent=0 // loop_footer
    %s16 = sadd.s32 1, %s12
  $region7: #{iresidual_forward.4} parent=0 // loop_footer_branch
    %11 = sbr.rel target = $region3
  $region8: #{iresidual_forward.4} parent=0 // loop_exit
    _

// kernel: iresidual_forward.5
$region0: #{iresidual_forward.5}
  #allocation0 [shape = 'u32[]', space=smem, size = 0x4, offset = 0x4, fixed_abs, tag = 'smem constant byte address 0x4 - core index']
  #allocation1 [shape = 'u32[144,128]{1,0:T(1,128)}', space=vmem, size = 0x12000, scoped, tag = 'internal scratch']
  %s0 = inlined_call_operand.vmem [shape: f32[8,16,128], index: 0, kind: input, shape index: {}]
  %s1 = inlined_call_operand.vmem [shape: f32[8,16,128], index: 1, kind: input, shape index: {}]
  %s2 = inlined_call_operand.vmem [shape: f32[1,128], index: 2, kind: input, shape index: {}]
  %s3 = inlined_call_operand.vmem [shape: f32[1,128], index: 3, kind: input, shape index: {}]
  %s4 = inlined_call_operand.vmem [shape: f32[8,16,128], index: 4, kind: output, shape index: {}]
  %s5 = sld [smem:[#allocation0]]
  $region49: #{iresidual_forward.5} parent=0
    _
  %s7 = ssub.s32 1, %s5
  %s8 = scalar_select 0, %s7, %s5
  loop: start=0, step=1, limit=4
  $region2: #{iresidual_forward.5} parent=0 // loop_pre_header
    _
  $region3: #{iresidual_forward.5} parent=0 // loop_header
    %s10 = sphi 0, %s14
    %p11 = scmp.ge.s32.totalorder %s10, 4
    %s20 = sphi 0, %s22
    %s23 = sphi 0, %s20
    %s24 = sphi 0, %s23
    %s40 = sphi 0, %s24
    %s46 = sphi 0, %s48
    %s49 = sphi 0, %s46
    %s50 = sphi 0, %s49
    %s66 = sphi 0, %s50
    %s70 = sphi 0, %s70
    %s72 = sphi 0, %s70
    %s73 = sphi 0, %s72
    %s87 = sphi 0, %s73
    %s91 = sphi 0, %s91
    %s93 = sphi 0, %s91
    %s94 = sphi 0, %s93
    %s108 = sphi 0, %s94
    %s114 = sphi 0, %s116
    %s117 = sphi 0, %s114
    %s118 = sphi 0, %s117
    %s134 = sphi 0, %s118
  $region4: #{iresidual_forward.5} parent=0 // loop_header_branch
    %13 = sbr.rel (%p11) target = $region8
  $region5: #{iresidual_forward.5} parent=0 // loop_body
    %s15 = ssub.s32 %s10, 1
    %s16 = ssub.s32 %s10, 2
    %s17 = sadd.s32 %s10, 1
    %s18 = ssub.s32 %s10, %s17
    %p19 = scmp.eq.s32.totalorder %s18, 0
    %s21 = sadd.s32 %s20, 1
    %s22 = scalar_select %p19, %s20, %s21
    %p25 = pneg %p19
    %p26 = scmp.eq.s32.totalorder %s10, 1
    %p27 = por %p25, %p26
    %p28 = scmp.ne.s32.totalorder %s20, %s23
    %p29 = scmp.eq.s32.totalorder %s10, 0
    %p30 = por %p28, %p29
    %p31 = scmp.ne.s32.totalorder %s20, %s23
    %p32 = scmp.eq.s32.totalorder %s15, 1
    %p33 = por %p31, %p32
    %p34 = scmp.ne.s32.totalorder %s23, %s24
    %p35 = scmp.eq.s32.totalorder %s15, 0
    %p36 = por %p34, %p35
    %p37 = scmp.ne.s32.totalorder %s23, %s24
    %p38 = scmp.eq.s32.totalorder %s16, 1
    %p39 = por %p37, %p38
    %p41 = scmp.ne.s32.totalorder %s24, %s40
    %p42 = scmp.eq.s32.totalorder %s16, 0
    %p43 = por %p41, %p42
    %s44 = ssub.s32 %s10, %s17
    %p45 = scmp.eq.s32.totalorder %s44, 0
    %s47 = sadd.s32 %s46, 1
    %s48 = scalar_select %p45, %s46, %s47
    %p51 = pneg %p45
    %p52 = scmp.eq.s32.totalorder %s10, 1
    %p53 = por %p51, %p52
    %p54 = scmp.ne.s32.totalorder %s46, %s49
    %p55 = scmp.eq.s32.totalorder %s10, 0
    %p56 = por %p54, %p55
    %p57 = scmp.ne.s32.totalorder %s46, %s49
    %p58 = scmp.eq.s32.totalorder %s15, 1
    %p59 = por %p57, %p58
    %p60 = scmp.ne.s32.totalorder %s49, %s50
    %p61 = scmp.eq.s32.totalorder %s15, 0
    %p62 = por %p60, %p61
    %p63 = scmp.ne.s32.totalorder %s49, %s50
    %p64 = scmp.eq.s32.totalorder %s16, 1
    %p65 = por %p63, %p64
    %p67 = scmp.ne.s32.totalorder %s50, %s66
    %p68 = scmp.eq.s32.totalorder %s16, 0
    %p69 = por %p67, %p68
    %s71 = sadd.s32 %s70, 1
    %p74 = scmp.eq.s32.totalorder %s10, 1
    %p75 = scmp.ne.s32.totalorder %s70, %s72
    %p76 = scmp.eq.s32.totalorder %s10, 0
    %p77 = por %p75, %p76
    %p78 = scmp.ne.s32.totalorder %s70, %s72
    %p79 = scmp.eq.s32.totalorder %s15, 1
    %p80 = por %p78, %p79
    %p81 = scmp.ne.s32.totalorder %s72, %s73
    %p82 = scmp.eq.s32.totalorder %s15, 0
    %p83 = por %p81, %p82
    %p84 = scmp.ne.s32.totalorder %s72, %s73
    %p85 = scmp.eq.s32.totalorder %s16, 1
    %p86 = por %p84, %p85
    %p88 = scmp.ne.s32.totalorder %s73, %s87
    %p89 = scmp.eq.s32.totalorder %s16, 0
    %p90 = por %p88, %p89
    %s92 = sadd.s32 %s91, 1
    %p95 = scmp.eq.s32.totalorder %s10, 1
    %p96 = scmp.ne.s32.totalorder %s91, %s93
    %p97 = scmp.eq.s32.totalorder %s10, 0
    %p98 = por %p96, %p97
    %p99 = scmp.ne.s32.totalorder %s91, %s93
    %p100 = scmp.eq.s32.totalorder %s15, 1
    %p101 = por %p99, %p100
    %p102 = scmp.ne.s32.totalorder %s93, %s94
    %p103 = scmp.eq.s32.totalorder %s15, 0
    %p104 = por %p102, %p103
    %p105 = scmp.ne.s32.totalorder %s93, %s94
    %p106 = scmp.eq.s32.totalorder %s16, 1
    %p107 = por %p105, %p106
    %p109 = scmp.ne.s32.totalorder %s94, %s108
    %p110 = scmp.eq.s32.totalorder %s16, 0
    %p111 = por %p109, %p110
    %s112 = ssub.s32 %s10, %s17
    %p113 = scmp.eq.s32.totalorder %s112, 0
    %s115 = sadd.s32 %s114, 1
    %s116 = scalar_select %p113, %s114, %s115
    %p119 = pneg %p113
    %p120 = scmp.eq.s32.totalorder %s10, 1
    %p121 = por %p119, %p120
    %p122 = scmp.ne.s32.totalorder %s114, %s117
    %p123 = scmp.eq.s32.totalorder %s10, 0
    %p124 = por %p122, %p123
    %p125 = scmp.ne.s32.totalorder %s114, %s117
    %p126 = scmp.eq.s32.totalorder %s15, 1
    %p127 = por %p125, %p126
    %p128 = scmp.ne.s32.totalorder %s117, %s118
    %p129 = scmp.eq.s32.totalorder %s15, 0
    %p130 = por %p128, %p129
    %p131 = scmp.ne.s32.totalorder %s117, %s118
    %p132 = scmp.eq.s32.totalorder %s16, 1
    %p133 = por %p131, %p132
    %p135 = scmp.ne.s32.totalorder %s118, %s134
    %p136 = scmp.eq.s32.totalorder %s16, 0
    %p137 = por %p135, %p136
    %p138 = scmp.le.s32.totalorder 1, %s10
    %p139 = scmp.lt.s32.totalorder %s10, 3
    %p140 = pnand %p138, %p139
    %p141 = pneg %p140
    // Predicated region
    $region9: #{iresidual_forward.5} parent=5 // pred_check
      _
    $region10: #{iresidual_forward.5} parent=5 // pred_check_branch
      %143 = sbr.rel (%p140) target = $region12
    $region11: #{iresidual_forward.5} parent=5 // pred_region
      %s144 = ssub.s32 %s10, 1
      // Predicated region
      $region13: #{iresidual_forward.5} parent=11 // pred_check
        %p145 = pneg %p83
      $region14: #{iresidual_forward.5} parent=11 // pred_check_branch
        %147 = sbr.rel (%p145) target = $region16
      $region15: #{iresidual_forward.5} parent=11 // pred_region
        _
      $region16: #{iresidual_forward.5} parent=11 // pred_fallthru
        _
      // Predicated region
      $region17: #{iresidual_forward.5} parent=11 // pred_check
        %p148 = pneg %p104
      $region18: #{iresidual_forward.5} parent=11 // pred_check_branch
        %150 = sbr.rel (%p148) target = $region20
      $region19: #{iresidual_forward.5} parent=11 // pred_region
        _
      $region20: #{iresidual_forward.5} parent=11 // pred_fallthru
        _
    $region12: #{iresidual_forward.5} parent=5 // pred_fallthru
      _
    %p151 = scmp.lt.s32.totalorder %s10, 2
    // Predicated region
    $region21: #{iresidual_forward.5} parent=5 // pred_check
      %p152 = pneg %p151
    $region22: #{iresidual_forward.5} parent=5 // pred_check_branch
      %154 = sbr.rel (%p152) target = $region24
    $region23: #{iresidual_forward.5} parent=5 // pred_region
      // Predicated region
      $region25: #{iresidual_forward.5} parent=23 // pred_check
        %p155 = pneg %p30
      $region26: #{iresidual_forward.5} parent=23 // pred_check_branch
        %157 = sbr.rel (%p155) target = $region28
      $region27: #{iresidual_forward.5} parent=23 // pred_region
        %s158 = smul.u32 4, %s10
        %p159 = scmp.lt.s32.totalorder %s158, 7
        %s160 = scalar_select %p159, %s158, 7
        %s161 = smul.addr %s160, 2
        %s162 = smul.addr %s161, 8
        %s163 = scalar_lea.vmem %s0, %s162
        %s164 = smul.u32 4, %s10
      $region28: #{iresidual_forward.5} parent=23 // pred_fallthru
        _
      // Predicated region
      $region29: #{iresidual_forward.5} parent=23 // pred_check
        %p165 = pneg %p56
      $region30: #{iresidual_forward.5} parent=23 // pred_check_branch
        %167 = sbr.rel (%p165) target = $region32
      $region31: #{iresidual_forward.5} parent=23 // pred_region
        %s168 = smul.u32 4, %s10
        %p169 = scmp.lt.s32.totalorder %s168, 7
        %s170 = scalar_select %p169, %s168, 7
        %s171 = smul.addr %s170, 2
        %s172 = smul.addr %s171, 8
        %s173 = scalar_lea.vmem %s1, %s172
        %s174 = smul.u32 4, %s10
      $region32: #{iresidual_forward.5} parent=23 // pred_fallthru
        _
    $region24: #{iresidual_forward.5} parent=5 // pred_fallthru
      _
    %p175 = scmp.le.s32.totalorder 1, %s10
    %p176 = scmp.lt.s32.totalorder %s10, 3
    %p177 = pnand %p175, %p176
    %p178 = pneg %p177
    // Predicated region
    $region33: #{iresidual_forward.5} parent=5 // pred_check
      _
    $region34: #{iresidual_forward.5} parent=5 // pred_check_branch
      %180 = sbr.rel (%p177) target = $region36
    $region35: #{iresidual_forward.5} parent=5 // pred_region
      %s181 = ssub.s32 %s10, 1
      %s182 = smul.u32 4, %s15
      %p183 = scmp.lt.s32.totalorder %s182, 7
      %s184 = scalar_select %p183, %s182, 7
      %s185 = smul.addr %s184, 2
      %s186 = smul.addr %s185, 8
      %s187 = scalar_lea.vmem %s0, %s186
      %p188 = pneg %p36
      %p189 = pneg %p33
      %s190 = smul.u32 4, %s15
      %p191 = scmp.lt.s32.totalorder %s190, 7
      %s192 = scalar_select %p191, %s190, 7
      %s193 = smul.addr %s192, 2
      %s194 = smul.addr %s193, 8
      %s195 = scalar_lea.vmem %s1, %s194
      %p196 = pneg %p62
      %p197 = pneg %p59
      %p198 = pneg %p83
      %p199 = pneg %p80
      %p200 = pneg %p104
      %p201 = pneg %p101
      %p202 = pneg %p130
      %p203 = pneg %p127
      %s204 = smul.u32 4, %s15
      %p205 = scmp.lt.s32.totalorder %s204, 7
      %s206 = scalar_select %p205, %s204, 7
      %s207 = smul.addr %s206, 2
      %s208 = smul.addr %s207, 8
      %s209 = scalar_lea.vmem %s4, %s208
      %s210 = smul.u32 4, %s15
      %p211 = scmp.lt.s32.totalorder %s210, 7
      %s212 = scalar_select %p211, %s210, 7
      %s213 = smul.addr %s212, 2
      %s214 = smul.addr %s213, 8
      %s215 = scalar_lea.vmem %s0, %s214
      %s216 = smul.u32 4, %s15
      %s217 = smul.u32 4, %s15
      %p218 = scmp.lt.s32.totalorder %s217, 7
      %s219 = scalar_select %p218, %s217, 7
      %s220 = smul.addr %s219, 2
      %s221 = smul.addr %s220, 8
      %s222 = scalar_lea.vmem %s1, %s221
      %s223 = smul.u32 4, %s15
      %s224 = smul.u32 4, %s15
      %p225 = scmp.lt.s32.totalorder %s224, 7
      %s226 = scalar_select %p225, %s224, 7
      %s227 = smul.addr %s226, 2
      %s228 = smul.addr %s227, 8
      %s229 = scalar_lea.vmem %s4, %s228
      %s230 = smul.u32 4, %s15
      %v231 = vld [vmem:[%s215] sm:$0xff]
      %v232 = vld [vmem:[%s215 + $0x8] sm:$0xff]
      %v233 = vld [vmem:[%s215 + $0x10] sm:$0xff]
      %v234 = vld [vmem:[%s215 + $0x18] sm:$0xff]
      %v235 = vld [vmem:[%s215 + $0x20] sm:$0xff]
      %v236 = vld [vmem:[%s215 + $0x28] sm:$0xff]
      %v237 = vld [vmem:[%s215 + $0x30] sm:$0xff]
      %v238 = vld [vmem:[%s215 + $0x38] sm:$0xff]
      %v239 = vld [vmem:[%s2] sm:$0x1]
      %v241 = vlaneseq
      %v242 = vshrl.u32 %v241, 7
      %v243 = vsub.s32 0, %v242
      %v244 = vrot.slane %v239, %v243
      %v246 = vmul.f32 %v231, %v244
      %v247 = vmul.f32 %v232, %v244
      %v248 = vmul.f32 %v233, %v244
      %v249 = vmul.f32 %v234, %v244
      %v250 = vmul.f32 %v235, %v244
      %v251 = vmul.f32 %v236, %v244
      %v252 = vmul.f32 %v237, %v244
      %v253 = vmul.f32 %v238, %v244
      %v254 = vld [vmem:[%s3] sm:$0x1]
      %v256 = vlaneseq
      %v257 = vshrl.u32 %v256, 7
      %v258 = vsub.s32 0, %v257
      %v259 = vrot.slane %v254, %v258
      %v261 = vadd.f32 %v246, %v259
      %v262 = vadd.f32 %v247, %v259
      %v263 = vadd.f32 %v248, %v259
      %v264 = vadd.f32 %v249, %v259
      %v265 = vadd.f32 %v250, %v259
      %v266 = vadd.f32 %v251, %v259
      %v267 = vadd.f32 %v252, %v259
      %v268 = vadd.f32 %v253, %v259
      %vm269 = vcmp.gt.f32.partialorder %v261, 0.0
      %vm270 = vcmp.gt.f32.partialorder %v262, 0.0
      %vm271 = vcmp.gt.f32.partialorder %v263, 0.0
      %vm272 = vcmp.gt.f32.partialorder %v264, 0.0
      %vm273 = vcmp.gt.f32.partialorder %v265, 0.0
      %vm274 = vcmp.gt.f32.partialorder %v266, 0.0
      %vm275 = vcmp.gt.f32.partialorder %v267, 0.0
      %vm276 = vcmp.gt.f32.partialorder %v268, 0.0
      %v277 = vmul.f32 %v261, 0.01
      %v278 = vmul.f32 %v262, 0.01
      %v279 = vmul.f32 %v263, 0.01
      %v280 = vmul.f32 %v264, 0.01
      %v281 = vmul.f32 %v265, 0.01
      %v282 = vmul.f32 %v266, 0.01
      %v283 = vmul.f32 %v267, 0.01
      %v284 = vmul.f32 %v268, 0.01
      %v285 = vsel %vm269, %v261, %v277
      %v286 = vsel %vm270, %v262, %v278
      %v287 = vsel %vm271, %v263, %v279
      %v288 = vsel %vm272, %v264, %v280
      %v289 = vsel %vm273, %v265, %v281
      %v290 = vsel %vm274, %v266, %v282
      %v291 = vsel %vm275, %v267, %v283
      %v292 = vsel %vm276, %v268, %v284
      %v293 = vld [vmem:[%s222] sm:$0xff]
      %v294 = vld [vmem:[%s222 + $0x8] sm:$0xff]
      %v295 = vld [vmem:[%s222 + $0x10] sm:$0xff]
      %v296 = vld [vmem:[%s222 + $0x18] sm:$0xff]
      %v297 = vld [vmem:[%s222 + $0x20] sm:$0xff]
      %v298 = vld [vmem:[%s222 + $0x28] sm:$0xff]
      %v299 = vld [vmem:[%s222 + $0x30] sm:$0xff]
      %v300 = vld [vmem:[%s222 + $0x38] sm:$0xff]
      %v301 = vadd.f32 %v285, %v293
      %v302 = vadd.f32 %v286, %v294
      %v303 = vadd.f32 %v287, %v295
      %v304 = vadd.f32 %v288, %v296
      %v305 = vadd.f32 %v289, %v297
      %v306 = vadd.f32 %v290, %v298
      %v307 = vadd.f32 %v291, %v299
      %v308 = vadd.f32 %v292, %v300
      %309 = vst [vmem:[%s229] sm:$0xff] %v301
      %310 = vst [vmem:[%s229 + $0x8] sm:$0xff] %v302
      %311 = vst [vmem:[%s229 + $0x10] sm:$0xff] %v303
      %312 = vst [vmem:[%s229 + $0x18] sm:$0xff] %v304
      %313 = vst [vmem:[%s229 + $0x20] sm:$0xff] %v305
      %314 = vst [vmem:[%s229 + $0x28] sm:$0xff] %v306
      %315 = vst [vmem:[%s229 + $0x30] sm:$0xff] %v307
      %316 = vst [vmem:[%s229 + $0x38] sm:$0xff] %v308
      %s317 = smul.u32 4, %s15
      %p318 = scmp.lt.s32.totalorder %s317, 7
      %s319 = scalar_select %p318, %s317, 7
      %s320 = smul.addr %s319, 2
      %s321 = smul.addr %s320, 8
      %s322 = scalar_lea.vmem %s4, %s321
      // Predicated region
      $region37: #{iresidual_forward.5} parent=35 // pred_check
        %p323 = pneg %p127
      $region38: #{iresidual_forward.5} parent=35 // pred_check_branch
        %325 = sbr.rel (%p323) target = $region40
      $region39: #{iresidual_forward.5} parent=35 // pred_region
        %s326 = smul.u32 4, %s15
      $region40: #{iresidual_forward.5} parent=35 // pred_fallthru
        _
    $region36: #{iresidual_forward.5} parent=5 // pred_fallthru
      _
    %p327 = scmp.le.s32.totalorder 2, %s10
    // Predicated region
    $region41: #{iresidual_forward.5} parent=5 // pred_check
      %p328 = pneg %p327
    $region42: #{iresidual_forward.5} parent=5 // pred_check_branch
      %330 = sbr.rel (%p328) target = $region44
    $region43: #{iresidual_forward.5} parent=5 // pred_region
      %s331 = ssub.s32 %s10, 2
      // Predicated region
      $region45: #{iresidual_forward.5} parent=43 // pred_check
        %p332 = pneg %p133
      $region46: #{iresidual_forward.5} parent=43 // pred_check_branch
        %334 = sbr.rel (%p332) target = $region48
      $region47: #{iresidual_forward.5} parent=43 // pred_region
        %s335 = smul.u32 4, %s16
        %p336 = scmp.lt.s32.totalorder %s335, 7
        %s337 = scalar_select %p336, %s335, 7
        %s338 = smul.addr %s337, 2
        %s339 = smul.addr %s338, 8
        %s340 = scalar_lea.vmem %s4, %s339
      $region48: #{iresidual_forward.5} parent=43 // pred_fallthru
        _
    $region44: #{iresidual_forward.5} parent=5 // pred_fallthru
      _
  $region6: #{iresidual_forward.5} parent=0 // loop_footer
    %s14 = sadd.s32 1, %s10
  $region7: #{iresidual_forward.5} parent=0 // loop_footer_branch
    %9 = sbr.rel target = $region3
  $region8: #{iresidual_forward.5} parent=0 // loop_exit
    _

</llo_original>
